<compile_context>
chip_gen: v7x
topology: tpu7x:2x2x1
jax: 0.10.0
libtpu: 0.0.40
codegen_flags: <defaults>
</compile_context>

<pallas_src>
import functools
import math

import jax
import jax.numpy as jnp
from jax.experimental import pallas as pl
from jax.experimental.pallas import tpu as pltpu

F32 = jnp.float32
BF16 = jnp.bfloat16
_VMEM = pl.BlockSpec(memory_space=pltpu.MemorySpace.VMEM)


def _gelu_tanh(x):
    c = math.sqrt(2.0 / math.pi)
    return 0.5 * x * (1.0 + jnp.tanh(c * (x + 0.044715 * x * x * x)))


# ------------------- kernel 1: input RMSNorm + fused QKV projection (all blocks) -------------------

def _pre_attn_kernel(*refs, num_blocks, eps):
    xs = refs[0 * num_blocks:1 * num_blocks]      # [M_i, D_i] f32
    lnw = refs[1 * num_blocks:2 * num_blocks]     # [1, D_i]  f32
    wqkv = refs[2 * num_blocks:3 * num_blocks]    # [D_i, (H+2*Hkv)*Dh] bf16 (concatenated Wq|Wk|Wv)
    outs = refs[3 * num_blocks:4 * num_blocks]    # [M_i, (H+2*Hkv)*Dh] f32
    for i in range(num_blocks):
        x = xs[i][...]
        var = jnp.mean(x * x, axis=-1, keepdims=True)
        xn = x * jax.lax.rsqrt(var + eps) * (1.0 + lnw[i][...])   # Gemma: (1 + weight)
        outs[i][...] = jnp.dot(xn.astype(BF16), wqkv[i][...],
                               preferred_element_type=F32)


def pre_attn_fused(xs, ln_ws, wqkvs, eps):
    num_blocks = len(xs)
    out_shapes = tuple(jax.ShapeDtypeStruct((x.shape[0], w.shape[1]), F32)
                       for x, w in zip(xs, wqkvs))
    return pl.pallas_call(
        functools.partial(_pre_attn_kernel, num_blocks=num_blocks, eps=eps),
        out_shape=out_shapes,
        in_specs=[_VMEM] * (3 * num_blocks),
        out_specs=tuple([_VMEM] * num_blocks),
    )(*xs, *ln_ws, *wqkvs)


# ------------------- kernel 2: joint attention core (GQA, softclamp, mask, softmax, PV) -------------------

def _attn_kernel(q_ref, k_ref, v_ref, m_ref, o_ref, *, scale_over_clamp, softclamp, n_rep):
    q = q_ref[0]            # [H,   T, Dh] f32 (RoPE already applied)
    k = k_ref[0]            # [Hkv, T, Dh]
    v = v_ref[0]            # [Hkv, T, Dh]
    mask = m_ref[0, 0]      # [T, T] additive
    hkv, t, dh = k.shape
    h = hkv * n_rep
    # GQA: expand K/V across query-head groups in VMEM only (no HBM duplication / repeat_kv).
    k = jnp.broadcast_to(k[:, None], (hkv, n_rep, t, dh)).reshape(h, t, dh)
    v = jnp.broadcast_to(v[:, None], (hkv, n_rep, t, dh)).reshape(h, t, dh)

    s = jnp.einsum("hqd,hkd->hqk", q.astype(BF16), k.astype(BF16),
                   preferred_element_type=F32)
    # folded: (s * 1/sqrt(Dh)) / softclamp  ->  tanh  ->  * softclamp  ->  + mask
    s = jnp.tanh(s * scale_over_clamp) * softclamp + mask[None]
    s = s - jnp.max(s, axis=-1, keepdims=True)          # stable softmax in f32
    p = jnp.exp(s)
    p = p * pl.reciprocal(jnp.sum(p, axis=-1, keepdims=True), approx=True)
    o_ref[0] = jnp.einsum("hqk,hkd->hqd", p.astype(BF16), v.astype(BF16),
                          preferred_element_type=F32)


def attention_fused(q, k, v, mask, softclamp):
    """q: [B,H,T,Dh]; k,v: [B,Hkv,T,Dh]; mask: [B,1,T,T] additive -> [B,H,T,Dh]."""
    B, H, T, Dh = q.shape
    Hkv = k.shape[1]
    n_rep = H // Hkv
    scale = 1.0 / math.sqrt(Dh)
    return pl.pallas_call(
        functools.partial(_attn_kernel, scale_over_clamp=scale / softclamp,
                          softclamp=softclamp, n_rep=n_rep),
        out_shape=jax.ShapeDtypeStruct((B, H, T, Dh), F32),
        grid=(B,),
        in_specs=[
            pl.BlockSpec((1, H, T, Dh), lambda b: (b, 0, 0, 0)),
            pl.BlockSpec((1, Hkv, T, Dh), lambda b: (b, 0, 0, 0)),
            pl.BlockSpec((1, Hkv, T, Dh), lambda b: (b, 0, 0, 0)),
            pl.BlockSpec((1, 1, T, T), lambda b: (b, 0, 0, 0)),
        ],
        out_specs=pl.BlockSpec((1, H, T, Dh), lambda b: (b, 0, 0, 0)),
        compiler_params=pltpu.CompilerParams(dimension_semantics=("parallel",)),
    )(q, k, v, mask)


# --------- kernel 3: o_proj + residual + post RMSNorm + fused gate/up MLP + residual (all blocks) ---------

def _post_kernel(*refs, num_blocks, eps, inter_sizes):
    a = refs[0 * num_blocks:1 * num_blocks]       # [M_i, H*Dh] f32 attention slice
    res = refs[1 * num_blocks:2 * num_blocks]     # [M_i, D_i]  f32 residual (layer input)
    wo = refs[2 * num_blocks:3 * num_blocks]      # [H*Dh, D_i] bf16
    pln = refs[3 * num_blocks:4 * num_blocks]     # [1, D_i]    f32
    wgu = refs[4 * num_blocks:5 * num_blocks]     # [D_i, 2*I_i] bf16 (concatenated Wgate|Wup)
    wdn = refs[5 * num_blocks:6 * num_blocks]     # [I_i, D_i]  bf16
    outs = refs[6 * num_blocks:7 * num_blocks]    # [M_i, D_i]  f32
    for i in range(num_blocks):
        h = res[i][...] + jnp.dot(a[i][...].astype(BF16), wo[i][...],
                                  preferred_element_type=F32)
        var = jnp.mean(h * h, axis=-1, keepdims=True)
        xn = h * jax.lax.rsqrt(var + eps) * (1.0 + pln[i][...])
        gu = jnp.dot(xn.astype(BF16), wgu[i][...], preferred_element_type=F32)
        I = inter_sizes[i]
        act = _gelu_tanh(gu[:, :I]) * gu[:, I:]
        outs[i][...] = h + jnp.dot(act.astype(BF16), wdn[i][...],
                                   preferred_element_type=F32)


def post_attn_fused(attn_slices, residuals, wos, post_lns, wgus, wdns, eps, inter_sizes):
    num_blocks = len(attn_slices)
    out_shapes = tuple(jax.ShapeDtypeStruct(r.shape, F32) for r in residuals)
    return pl.pallas_call(
        functools.partial(_post_kernel, num_blocks=num_blocks, eps=eps,
                          inter_sizes=tuple(inter_sizes)),
        out_shape=out_shapes,
        in_specs=[_VMEM] * (6 * num_blocks),
        out_specs=tuple([_VMEM] * num_blocks),
    )(*attn_slices, *residuals, *wos, *post_lns, *wgus, *wdns)


# ------------------------- RoPE glue (plain JAX) -------------------------

def rope_cos_sin(position_ids, head_dim, base):
    inv_freq = 1.0 / (base ** (jnp.arange(0, head_dim, 2, dtype=F32) / head_dim))
    freqs = position_ids[..., None].astype(F32) * inv_freq[None, None, :]   # [B, L, Dh/2]
    emb = jnp.concatenate([freqs, freqs], axis=-1)
    return jnp.cos(emb), jnp.sin(emb)


def rotate_half(x):
    half = x.shape[-1] // 2
    return jnp.concatenate([-x[..., half:], x[..., :half]], axis=-1)


def apply_rope(q, k, cos, sin):
    cos = cos[:, None, :, :]
    sin = sin[:, None, :, :]
    return q * cos + rotate_half(q) * sin, k * cos + rotate_half(k) * sin


# ------------------------- fused-weight preparation (host side, once) -------------------------

def prepare_fused(params):
    nb = len(params["q"])
    return {
        # concatenated projections, pre-cast to bf16 (halves weight DMA, native MXU dtype)
        "wqkv": [jnp.concatenate([params["q"][i], params["k"][i], params["v"][i]],
                                 axis=1).astype(BF16) for i in range(nb)],
        "wo": [params["o"][i].astype(BF16) for i in range(nb)],
        "wgu": [jnp.concatenate([params["gate"][i], params["up"][i]],
                                axis=1).astype(BF16) for i in range(nb)],
        "wdn": [params["down"][i].astype(BF16) for i in range(nb)],
        "input_ln": [params["input_ln"][i].reshape(1, -1) for i in range(nb)],
        "post_ln": [params["post_ln"][i].reshape(1, -1) for i in range(nb)],
    }


# ------------------------- JointDecoderLayer forward (Pallas path) -------------------------

def joint_decoder_layer_pallas(params, fused, hidden_states_all, attention_mask,
                               position_ids_all, *, num_heads, num_kv_heads, head_dim,
                               eps, softclamp, intermediate_sizes):
    num_blocks = len(hidden_states_all)
    B = hidden_states_all[0].shape[0]
    q_lens = [h.shape[1] for h in hidden_states_all]
    T = sum(q_lens)
    HD = num_heads * head_dim
    KD = num_kv_heads * head_dim

    # (1) fused input-RMSNorm + concatenated QKV projection  (ONE pallas_call for all blocks)
    x_flat = [h.reshape(B * L, -1) for h, L in zip(hidden_states_all, q_lens)]
    qkv_all = pre_attn_fused(x_flat, fused["input_ln"], fused["wqkv"], eps)

    # (2) glue: split heads, RoPE per block (block-local position ids), concat over tokens
    qs, ks, vs = [], [], []
    for i, L in enumerate(q_lens):
        qkv = qkv_all[i]
        q = qkv[:, :HD].reshape(B, L, num_heads, head_dim).transpose(0, 2, 1, 3)
        k = qkv[:, HD:HD + KD].reshape(B, L, num_kv_heads, head_dim).transpose(0, 2, 1, 3)
        v = qkv[:, HD + KD:].reshape(B, L, num_kv_heads, head_dim).transpose(0, 2, 1, 3)
        cos, sin = rope_cos_sin(position_ids_all[i], head_dim, params["rope_theta"])
        q, k = apply_rope(q, k, cos, sin)
        qs.append(q); ks.append(k); vs.append(v)
    q = jnp.concatenate(qs, axis=2)     # [B, H,   T, Dh]
    k = jnp.concatenate(ks, axis=2)     # [B, Hkv, T, Dh]   (no repeat_kv in HBM)
    v = jnp.concatenate(vs, axis=2)

    # (3) fused joint attention (ONE pallas_call, grid over batch)
    attn = attention_fused(q, k, v, attention_mask, softclamp)       # [B, H, T, Dh]
    attn = attn.transpose(0, 2, 1, 3).reshape(B, T, HD)

    # (4) fused o_proj + residual + post-RMSNorm + MLP + residual  (ONE pallas_call for all blocks)
    offs = [0]
    for L in q_lens:
        offs.append(offs[-1] + L)
    attn_slices = [attn[:, offs[i]:offs[i + 1], :].reshape(B * q_lens[i], HD)
                   for i in range(num_blocks)]
    residuals = [h.reshape(B * L, -1) for h, L in zip(hidden_states_all, q_lens)]
    outs = post_attn_fused(attn_slices, residuals, fused["wo"], fused["post_ln"],
                           fused["wgu"], fused["wdn"], eps, intermediate_sizes)
    return tuple(o.reshape(B, L, -1) for o, L in zip(outs, q_lens))


# ------------------------- plain-JAX reference (same bf16-matmul policy, independent impl) -------------------------

def _bf16_matmul(x, w):
    return jnp.dot(x.astype(BF16), w.astype(BF16), preferred_element_type=F32)


def rmsnorm_ref(x, w, eps):
    var = jnp.mean(x * x, axis=-1, keepdims=True)
    return x * jax.lax.rsqrt(var + eps) * (1.0 + w)


def joint_decoder_layer_ref(params, hidden_states_all, attention_mask, position_ids_all,
                            *, num_heads, num_kv_heads, head_dim, eps, softclamp):
    nb = len(hidden_states_all)
    B = hidden_states_all[0].shape[0]
    q_lens = [h.shape[1] for h in hidden_states_all]
    n_rep = num_heads // num_kv_heads
    pre = [rmsnorm_ref(h, params["input_ln"][i], eps)
           for i, h in enumerate(hidden_states_all)]
    qs, ks, vs = [], [], []
    for i, L in enumerate(q_lens):
        h = pre[i]
        q = _bf16_matmul(h, params["q"][i]).reshape(B, L, num_heads, head_dim).transpose(0, 2, 1, 3)
        k = _bf16_matmul(h, params["k"][i]).reshape(B, L, num_kv_heads, head_dim).transpose(0, 2, 1, 3)
        v = _bf16_matmul(h, params["v"][i]).reshape(B, L, num_kv_heads, head_dim).transpose(0, 2, 1, 3)
        cos, sin = rope_cos_sin(position_ids_all[i], head_dim, params["rope_theta"])
        q, k = apply_rope(q, k, cos, sin)
        qs.append(q)
        ks.append(jnp.repeat(k, n_rep, axis=1))
        vs.append(jnp.repeat(v, n_rep, axis=1))
    q = jnp.concatenate(qs, axis=2); k = jnp.concatenate(ks, axis=2); v = jnp.concatenate(vs, axis=2)
    s = jnp.einsum("bhqd,bhkd->bhqk", q.astype(BF16), k.astype(BF16),
                   preferred_element_type=F32) / math.sqrt(head_dim)
    s = jnp.tanh(s / softclamp) * softclamp + attention_mask
    p = jax.nn.softmax(s, axis=-1)
    attn = jnp.einsum("bhqk,bhkd->bhqd", p.astype(BF16), v.astype(BF16),
                      preferred_element_type=F32)
    T = sum(q_lens)
    attn = attn.transpose(0, 2, 1, 3).reshape(B, T, num_heads * head_dim)
    offs = [0]
    for L in q_lens:
        offs.append(offs[-1] + L)
    outs = []
    for i in range(nb):
        a = attn[:, offs[i]:offs[i + 1], :]
        h1 = hidden_states_all[i] + _bf16_matmul(a, params["o"][i])
        xn = rmsnorm_ref(h1, params["post_ln"][i], eps)
        g = _bf16_matmul(xn, params["gate"][i])
        u = _bf16_matmul(xn, params["up"][i])
        act = jax.nn.gelu(g, approximate=True) * u
        outs.append(h1 + _bf16_matmul(act, params["down"][i]))
    return tuple(outs)


# ------------------------- main -------------------------

if __name__ == "__main__":
    HIDDEN_SIZES = (32, 16, 24)
    INTERMEDIATE_SIZES = (64, 32, 48)
    NUM_HEADS = 4
    HEAD_DIM = 8
    NUM_KV_HEADS = 2
    ROPE_THETA = 10000.0
    RMS_EPS = 1e-6
    SOFTCLAMP = 50.0
    BSZ = 2
    Q_LENS = (8, 4, 4)
    TOTAL = sum(Q_LENS)

    key = jax.random.PRNGKey(0)

    def nxt():
        global key
        key, sub = jax.random.split(key)
        return sub

    def w(shape, scale=0.2):
        return jax.random.normal(nxt(), shape, dtype=F32) * scale

    params = {
        "rope_theta": ROPE_THETA,
        "q":    [w((hs, NUM_HEADS * HEAD_DIM)) for hs in HIDDEN_SIZES],
        "k":    [w((hs, NUM_KV_HEADS * HEAD_DIM)) for hs in HIDDEN_SIZES],
        "v":    [w((hs, NUM_KV_HEADS * HEAD_DIM)) for hs in HIDDEN_SIZES],
        "o":    [w((NUM_HEADS * HEAD_DIM, hs)) for hs in HIDDEN_SIZES],
        "gate": [w((hs, im)) for hs, im in zip(HIDDEN_SIZES, INTERMEDIATE_SIZES)],
        "up":   [w((hs, im)) for hs, im in zip(HIDDEN_SIZES, INTERMEDIATE_SIZES)],
        "down": [w((im, hs)) for hs, im in zip(HIDDEN_SIZES, INTERMEDIATE_SIZES)],
        "input_ln": [w((hs,), 0.1) for hs in HIDDEN_SIZES],
        "post_ln":  [w((hs,), 0.1) for hs in HIDDEN_SIZES],
    }

    hidden_states_all = tuple(
        jax.random.normal(nxt(), (BSZ, L, hs), dtype=F32)
        for L, hs in zip(Q_LENS, HIDDEN_SIZES)
    )
    # additive attention mask [B, 1, T, T]: causal inside the text block, full elsewhere
    causal = jnp.triu(jnp.full((Q_LENS[0], Q_LENS[0]), -1e9, dtype=F32), k=1)
    mask = jnp.zeros((TOTAL, TOTAL), dtype=F32)
    mask = mask.at[:Q_LENS[0], :Q_LENS[0]].set(causal)
    attention_mask = jnp.broadcast_to(mask[None, None], (BSZ, 1, TOTAL, TOTAL))
    # position ids per block, continuing across blocks
    offs = [0, Q_LENS[0], Q_LENS[0] + Q_LENS[1]]
    position_ids_all = tuple(
        jnp.broadcast_to(jnp.arange(o, o + L, dtype=jnp.int32)[None, :], (BSZ, L))
        for o, L in zip(offs, Q_LENS)
    )

    fused = prepare_fused(params)
    common = dict(num_heads=NUM_HEADS, num_kv_heads=NUM_KV_HEADS, head_dim=HEAD_DIM,
                  eps=RMS_EPS, softclamp=SOFTCLAMP)

    fwd_pallas = jax.jit(functools.partial(joint_decoder_layer_pallas,
                                           intermediate_sizes=INTERMEDIATE_SIZES, **common))
    out_pallas = fwd_pallas(params, fused, hidden_states_all, attention_mask, position_ids_all)
    out_pallas = jax.block_until_ready(out_pallas)

    out_ref = joint_decoder_layer_ref(params, hidden_states_all, attention_mask,
                                      position_ids_all, **common)
    out_ref = jax.block_until_ready(out_ref)

    for i, (a, b) in enumerate(zip(out_pallas, out_ref)):
        assert a.shape == (BSZ, Q_LENS[i], HIDDEN_SIZES[i]), (i, a.shape)
        err = jnp.max(jnp.abs(a - b))
        assert jnp.allclose(a, b, atol=2e-2, rtol=2e-2), (
            f"block {i} mismatch: max abs err {err}")

    print("KERNEL_OK")
</pallas_src>

<mosaic_0001>
module attributes {stable_mosaic.version = 11 : i64} {
  func.func @_pre_attn_kernel(%arg0: memref<16x32xf32, #tpu.memory_space<vmem>>, %arg1: memref<8x16xf32, #tpu.memory_space<vmem>>, %arg2: memref<8x24xf32, #tpu.memory_space<vmem>>, %arg3: memref<1x32xf32, #tpu.memory_space<vmem>>, %arg4: memref<1x16xf32, #tpu.memory_space<vmem>>, %arg5: memref<1x24xf32, #tpu.memory_space<vmem>>, %arg6: memref<32x64xbf16, #tpu.memory_space<vmem>>, %arg7: memref<16x64xbf16, #tpu.memory_space<vmem>>, %arg8: memref<24x64xbf16, #tpu.memory_space<vmem>>, %arg9: memref<16x64xf32, #tpu.memory_space<vmem>>, %arg10: memref<8x64xf32, #tpu.memory_space<vmem>>, %arg11: memref<8x64xf32, #tpu.memory_space<vmem>>) attributes {dimension_semantics = [], scalar_prefetch = 0 : i64, scratch_operands = 0 : i64, tpu.core_type = #tpu.core_type<tc>} {
    %c0 = arith.constant 0 : index
    %c0_0 = arith.constant 0 : index
    %0 = vector.load %arg0[%c0, %c0_0] : memref<16x32xf32, #tpu.memory_space<vmem>>, vector<16x32xf32>
    %1 = arith.mulf %0, %0 : vector<16x32xf32>
    %cst = arith.constant dense<0.000000e+00> : vector<16xf32>
    %2 = vector.multi_reduction <add>, %1, %cst [1] : vector<16x32xf32> to vector<16xf32>
    %3 = vector.shape_cast %2 : vector<16xf32> to vector<16x1xf32>
    %cst_1 = arith.constant 3.200000e+01 : f32
    %4 = vector.broadcast %cst_1 : f32 to vector<16x1xf32>
    %5 = arith.divf %3, %4 : vector<16x1xf32>
    %cst_2 = arith.constant 9.99999997E-7 : f32
    %6 = vector.broadcast %cst_2 : f32 to vector<16x1xf32>
    %7 = arith.addf %5, %6 : vector<16x1xf32>
    %8 = math.rsqrt %7 : vector<16x1xf32>
    %9 = vector.broadcast %8 : vector<16x1xf32> to vector<16x32xf32>
    %10 = arith.mulf %0, %9 : vector<16x32xf32>
    %c0_3 = arith.constant 0 : index
    %c0_4 = arith.constant 0 : index
    %11 = vector.load %arg3[%c0_3, %c0_4] : memref<1x32xf32, #tpu.memory_space<vmem>>, vector<1x32xf32>
    %cst_5 = arith.constant 1.000000e+00 : f32
    %12 = vector.broadcast %cst_5 : f32 to vector<1x32xf32>
    %13 = arith.addf %12, %11 : vector<1x32xf32>
    %14 = vector.broadcast %13 : vector<1x32xf32> to vector<16x32xf32>
    %15 = arith.mulf %10, %14 : vector<16x32xf32>
    %16 = arith.truncf %15 : vector<16x32xf32> to vector<16x32xbf16>
    %c0_6 = arith.constant 0 : index
    %c0_7 = arith.constant 0 : index
    %17 = vector.load %arg6[%c0_6, %c0_7] : memref<32x64xbf16, #tpu.memory_space<vmem>>, vector<32x64xbf16>
    %cst_8 = arith.constant dense<0.000000e+00> : vector<16x64xf32>
    %18 = tpu.matmul %16, %17, %cst_8 {dimension_numbers = #tpu.dot_dimension_numbers<[1], [0], [0], [1], [0, 0, 1, 1], [], []>} : vector<16x32xbf16>, vector<32x64xbf16>, vector<16x64xf32> -> vector<16x64xf32>
    %c0_9 = arith.constant 0 : index
    %c0_10 = arith.constant 0 : index
    %19 = vector.load %arg9[%c0_9, %c0_10] : memref<16x64xf32, #tpu.memory_space<vmem>>, vector<16x64xf32>
    tpu.vector_store %arg9[%c0_9, %c0_10], %18 {strides = array<i32>} : memref<16x64xf32, #tpu.memory_space<vmem>>, vector<16x64xf32>,
    %c0_11 = arith.constant 0 : index
    %c0_12 = arith.constant 0 : index
    %20 = vector.load %arg1[%c0_11, %c0_12] : memref<8x16xf32, #tpu.memory_space<vmem>>, vector<8x16xf32>
    %21 = arith.mulf %20, %20 : vector<8x16xf32>
    %cst_13 = arith.constant dense<0.000000e+00> : vector<8xf32>
    %22 = vector.multi_reduction <add>, %21, %cst_13 [1] : vector<8x16xf32> to vector<8xf32>
    %23 = vector.shape_cast %22 : vector<8xf32> to vector<8x1xf32>
    %cst_14 = arith.constant 1.600000e+01 : f32
    %24 = vector.broadcast %cst_14 : f32 to vector<8x1xf32>
    %25 = arith.divf %23, %24 : vector<8x1xf32>
    %cst_15 = arith.constant 9.99999997E-7 : f32
    %26 = vector.broadcast %cst_15 : f32 to vector<8x1xf32>
    %27 = arith.addf %25, %26 : vector<8x1xf32>
    %28 = math.rsqrt %27 : vector<8x1xf32>
    %29 = vector.broadcast %28 : vector<8x1xf32> to vector<8x16xf32>
    %30 = arith.mulf %20, %29 : vector<8x16xf32>
    %c0_16 = arith.constant 0 : index
    %c0_17 = arith.constant 0 : index
    %31 = vector.load %arg4[%c0_16, %c0_17] : memref<1x16xf32, #tpu.memory_space<vmem>>, vector<1x16xf32>
    %cst_18 = arith.constant 1.000000e+00 : f32
    %32 = vector.broadcast %cst_18 : f32 to vector<1x16xf32>
    %33 = arith.addf %32, %31 : vector<1x16xf32>
    %34 = vector.broadcast %33 : vector<1x16xf32> to vector<8x16xf32>
    %35 = arith.mulf %30, %34 : vector<8x16xf32>
    %36 = arith.truncf %35 : vector<8x16xf32> to vector<8x16xbf16>
    %c0_19 = arith.constant 0 : index
    %c0_20 = arith.constant 0 : index
    %37 = vector.load %arg7[%c0_19, %c0_20] : memref<16x64xbf16, #tpu.memory_space<vmem>>, vector<16x64xbf16>
    %cst_21 = arith.constant dense<0.000000e+00> : vector<8x64xf32>
    %38 = tpu.matmul %36, %37, %cst_21 {dimension_numbers = #tpu.dot_dimension_numbers<[1], [0], [0], [1], [0, 0, 1, 1], [], []>} : vector<8x16xbf16>, vector<16x64xbf16>, vector<8x64xf32> -> vector<8x64xf32>
    %c0_22 = arith.constant 0 : index
    %c0_23 = arith.constant 0 : index
    %39 = vector.load %arg10[%c0_22, %c0_23] : memref<8x64xf32, #tpu.memory_space<vmem>>, vector<8x64xf32>
    tpu.vector_store %arg10[%c0_22, %c0_23], %38 {strides = array<i32>} : memref<8x64xf32, #tpu.memory_space<vmem>>, vector<8x64xf32>,
    %c0_24 = arith.constant 0 : index
    %c0_25 = arith.constant 0 : index
    %40 = vector.load %arg2[%c0_24, %c0_25] : memref<8x24xf32, #tpu.memory_space<vmem>>, vector<8x24xf32>
    %41 = arith.mulf %40, %40 : vector<8x24xf32>
    %cst_26 = arith.constant dense<0.000000e+00> : vector<8xf32>
    %42 = vector.multi_reduction <add>, %41, %cst_26 [1] : vector<8x24xf32> to vector<8xf32>
    %43 = vector.shape_cast %42 : vector<8xf32> to vector<8x1xf32>
    %cst_27 = arith.constant 2.400000e+01 : f32
    %44 = vector.broadcast %cst_27 : f32 to vector<8x1xf32>
    %45 = arith.divf %43, %44 : vector<8x1xf32>
    %cst_28 = arith.constant 9.99999997E-7 : f32
    %46 = vector.broadcast %cst_28 : f32 to vector<8x1xf32>
    %47 = arith.addf %45, %46 : vector<8x1xf32>
    %48 = math.rsqrt %47 : vector<8x1xf32>
    %49 = vector.broadcast %48 : vector<8x1xf32> to vector<8x24xf32>
    %50 = arith.mulf %40, %49 : vector<8x24xf32>
    %c0_29 = arith.constant 0 : index
    %c0_30 = arith.constant 0 : index
    %51 = vector.load %arg5[%c0_29, %c0_30] : memref<1x24xf32, #tpu.memory_space<vmem>>, vector<1x24xf32>
    %cst_31 = arith.constant 1.000000e+00 : f32
    %52 = vector.broadcast %cst_31 : f32 to vector<1x24xf32>
    %53 = arith.addf %52, %51 : vector<1x24xf32>
    %54 = vector.broadcast %53 : vector<1x24xf32> to vector<8x24xf32>
    %55 = arith.mulf %50, %54 : vector<8x24xf32>
    %56 = arith.truncf %55 : vector<8x24xf32> to vector<8x24xbf16>
    %c0_32 = arith.constant 0 : index
    %c0_33 = arith.constant 0 : index
    %57 = vector.load %arg8[%c0_32, %c0_33] : memref<24x64xbf16, #tpu.memory_space<vmem>>, vector<24x64xbf16>
    %cst_34 = arith.constant dense<0.000000e+00> : vector<8x64xf32>
    %58 = tpu.matmul %56, %57, %cst_34 {dimension_numbers = #tpu.dot_dimension_numbers<[1], [0], [0], [1], [0, 0, 1, 1], [], []>} : vector<8x24xbf16>, vector<24x64xbf16>, vector<8x64xf32> -> vector<8x64xf32>
    %c0_35 = arith.constant 0 : index
    %c0_36 = arith.constant 0 : index
    %59 = vector.load %arg11[%c0_35, %c0_36] : memref<8x64xf32, #tpu.memory_space<vmem>>, vector<8x64xf32>
    tpu.vector_store %arg11[%c0_35, %c0_36], %58 {strides = array<i32>} : memref<8x64xf32, #tpu.memory_space<vmem>>, vector<8x64xf32>,
    return
  }
}

module attributes {stable_mosaic.version = 11 : i64} {
  func.func @_attn_kernel(%arg0: i32, %arg1: memref<1x4x16x8xf32, #tpu.memory_space<vmem>>, %arg2: memref<1x2x16x8xf32, #tpu.memory_space<vmem>>, %arg3: memref<1x2x16x8xf32, #tpu.memory_space<vmem>>, %arg4: memref<1x1x16x16xf32, #tpu.memory_space<vmem>>, %arg5: memref<1x4x16x8xf32, #tpu.memory_space<vmem>>) attributes {dimension_semantics = [#tpu.dimension_semantics<parallel>], iteration_bounds = array<i64: 2>, scalar_prefetch = 0 : i64, scratch_operands = 0 : i64, tpu.core_type = #tpu.core_type<tc>, window_params = [{transform_indices = @transform_0, window_bounds = array<i64: 1, 4, 16, 8>}, {transform_indices = @transform_1, window_bounds = array<i64: 1, 2, 16, 8>}, {transform_indices = @transform_2, window_bounds = array<i64: 1, 2, 16, 8>}, {transform_indices = @transform_3, window_bounds = array<i64: 1, 1, 16, 16>}, {transform_indices = @transform_4, window_bounds = array<i64: 1, 4, 16, 8>}]} {
    %c0 = arith.constant 0 : index
    %c0_0 = arith.constant 0 : index
    %c0_1 = arith.constant 0 : index
    %c0_2 = arith.constant 0 : index
    %0 = vector.load %arg1[%c0, %c0_0, %c0_1, %c0_2] : memref<1x4x16x8xf32, #tpu.memory_space<vmem>>, vector<1x4x16x8xf32>
    %1 = vector.shape_cast %0 : vector<1x4x16x8xf32> to vector<4x16x8xf32>
    %c0_3 = arith.constant 0 : index
    %c0_4 = arith.constant 0 : index
    %c0_5 = arith.constant 0 : index
    %c0_6 = arith.constant 0 : index
    %2 = vector.load %arg2[%c0_3, %c0_4, %c0_5, %c0_6] : memref<1x2x16x8xf32, #tpu.memory_space<vmem>>, vector<1x2x16x8xf32>
    %3 = vector.shape_cast %2 : vector<1x2x16x8xf32> to vector<2x16x8xf32>
    %c0_7 = arith.constant 0 : index
    %c0_8 = arith.constant 0 : index
    %c0_9 = arith.constant 0 : index
    %c0_10 = arith.constant 0 : index
    %4 = vector.load %arg3[%c0_7, %c0_8, %c0_9, %c0_10] : memref<1x2x16x8xf32, #tpu.memory_space<vmem>>, vector<1x2x16x8xf32>
    %5 = vector.shape_cast %4 : vector<1x2x16x8xf32> to vector<2x16x8xf32>
    %c0_11 = arith.constant 0 : index
    %c0_12 = arith.constant 0 : index
    %c0_13 = arith.constant 0 : index
    %c0_14 = arith.constant 0 : index
    %6 = vector.load %arg4[%c0_11, %c0_12, %c0_13, %c0_14] : memref<1x1x16x16xf32, #tpu.memory_space<vmem>>, vector<1x1x16x16xf32>
    %7 = vector.shape_cast %6 : vector<1x1x16x16xf32> to vector<16x16xf32>
    %8 = vector.shape_cast %3 : vector<2x16x8xf32> to vector<2x1x16x8xf32>
    %9 = vector.shape_cast %8 : vector<2x1x16x8xf32> to vector<2x1x16x8xf32>
    %10 = vector.broadcast %9 : vector<2x1x16x8xf32> to vector<2x2x16x8xf32>
    %11 = vector.shape_cast %10 : vector<2x2x16x8xf32> to vector<4x16x8xf32>
    %12 = vector.shape_cast %5 : vector<2x16x8xf32> to vector<2x1x16x8xf32>
    %13 = vector.shape_cast %12 : vector<2x1x16x8xf32> to vector<2x1x16x8xf32>
    %14 = vector.broadcast %13 : vector<2x1x16x8xf32> to vector<2x2x16x8xf32>
    %15 = vector.shape_cast %14 : vector<2x2x16x8xf32> to vector<4x16x8xf32>
    %16 = arith.truncf %1 : vector<4x16x8xf32> to vector<4x16x8xbf16>
    %17 = arith.truncf %11 : vector<4x16x8xf32> to vector<4x16x8xbf16>
    "tpu.trace_start"() <{level = 10 : i32, message = "hqd,hkd->hqk"}> : () -> ()
    %cst = arith.constant dense<0.000000e+00> : vector<4x16x16xf32>
    %18 = tpu.matmul %16, %17, %cst {dimension_numbers = #tpu.dot_dimension_numbers<[2], [2], [1], [1], [0, 0, 0, 1, 1, 1], [0], [0]>} : vector<4x16x8xbf16>, vector<4x16x8xbf16>, vector<4x16x16xf32> -> vector<4x16x16xf32>
    "tpu.trace_stop"() : () -> ()
    %cst_15 = arith.constant 0.00707106758 : f32
    %19 = vector.broadcast %cst_15 : f32 to vector<4x16x16xf32>
    %20 = arith.mulf %18, %19 : vector<4x16x16xf32>
    %21 = math.tanh %20 : vector<4x16x16xf32>
    %cst_16 = arith.constant 5.000000e+01 : f32
    %22 = vector.broadcast %cst_16 : f32 to vector<4x16x16xf32>
    %23 = arith.mulf %21, %22 : vector<4x16x16xf32>
    %24 = vector.shape_cast %7 : vector<16x16xf32> to vector<1x16x16xf32>
    %25 = vector.broadcast %24 : vector<1x16x16xf32> to vector<4x16x16xf32>
    %26 = arith.addf %23, %25 : vector<4x16x16xf32>
    %cst_17 = arith.constant dense<0xFF800000> : vector<4x16xf32>
    %27 = vector.multi_reduction <maximumf>, %26, %cst_17 [2] : vector<4x16x16xf32> to vector<4x16xf32>
    %28 = vector.shape_cast %27 : vector<4x16xf32> to vector<4x16x1xf32>
    %29 = vector.broadcast %28 : vector<4x16x1xf32> to vector<4x16x16xf32>
    %30 = arith.subf %26, %29 : vector<4x16x16xf32>
    %31 = math.exp %30 : vector<4x16x16xf32>
    %cst_18 = arith.constant dense<0.000000e+00> : vector<4x16xf32>
    %32 = vector.multi_reduction <add>, %31, %cst_18 [2] : vector<4x16x16xf32> to vector<4x16xf32>
    %33 = vector.shape_cast %32 : vector<4x16xf32> to vector<4x16x1xf32>
    %34 = tpu.reciprocal %33 {approx = true} : vector<4x16x1xf32> -> vector<4x16x1xf32>
    %35 = vector.broadcast %34 : vector<4x16x1xf32> to vector<4x16x16xf32>
    %36 = arith.mulf %31, %35 : vector<4x16x16xf32>
    %37 = arith.truncf %36 : vector<4x16x16xf32> to vector<4x16x16xbf16>
    %38 = arith.truncf %15 : vector<4x16x8xf32> to vector<4x16x8xbf16>
    "tpu.trace_start"() <{level = 10 : i32, message = "hqk,hkd->hqd"}> : () -> ()
    %cst_19 = arith.constant dense<0.000000e+00> : vector<4x16x8xf32>
    %39 = tpu.matmul %37, %38, %cst_19 {dimension_numbers = #tpu.dot_dimension_numbers<[2], [1], [1], [2], [0, 0, 0, 1, 1, 2], [0], [0]>} : vector<4x16x16xbf16>, vector<4x16x8xbf16>, vector<4x16x8xf32> -> vector<4x16x8xf32>
    "tpu.trace_stop"() : () -> ()
    %c0_20 = arith.constant 0 : index
    %c0_21 = arith.constant 0 : index
    %c0_22 = arith.constant 0 : index
    %c0_23 = arith.constant 0 : index
    %40 = vector.load %arg5[%c0_20, %c0_21, %c0_22, %c0_23] : memref<1x4x16x8xf32, #tpu.memory_space<vmem>>, vector<1x4x16x8xf32>
    %41 = vector.shape_cast %40 : vector<1x4x16x8xf32> to vector<4x16x8xf32>
    %42 = vector.shape_cast %39 : vector<4x16x8xf32> to vector<1x4x16x8xf32>
    tpu.vector_store %arg5[%c0_20, %c0_21, %c0_22, %c0_23], %42 {strides = array<i32>} : memref<1x4x16x8xf32, #tpu.memory_space<vmem>>, vector<1x4x16x8xf32>,
    return
  }
  func.func @transform_0(%arg0: i32) -> (i32, i32, i32, i32) {
    %c0_i32 = arith.constant 0 : i32
    %c0_i32_0 = arith.constant 0 : i32
    %c0_i32_1 = arith.constant 0 : i32
    %c0_i32_2 = arith.constant 0 : i32
    return %arg0, %c0_i32, %c0_i32_0, %c0_i32_1 : i32, i32, i32, i32
  }
  func.func @transform_1(%arg0: i32) -> (i32, i32, i32, i32) {
    %c0_i32 = arith.constant 0 : i32
    %c0_i32_0 = arith.constant 0 : i32
    %c0_i32_1 = arith.constant 0 : i32
    %c0_i32_2 = arith.constant 0 : i32
    return %arg0, %c0_i32, %c0_i32_0, %c0_i32_1 : i32, i32, i32, i32
  }
  func.func @transform_2(%arg0: i32) -> (i32, i32, i32, i32) {
    %c0_i32 = arith.constant 0 : i32
    %c0_i32_0 = arith.constant 0 : i32
    %c0_i32_1 = arith.constant 0 : i32
    %c0_i32_2 = arith.constant 0 : i32
    return %arg0, %c0_i32, %c0_i32_0, %c0_i32_1 : i32, i32, i32, i32
  }
  func.func @transform_3(%arg0: i32) -> (i32, i32, i32, i32) {
    %c0_i32 = arith.constant 0 : i32
    %c0_i32_0 = arith.constant 0 : i32
    %c0_i32_1 = arith.constant 0 : i32
    %c0_i32_2 = arith.constant 0 : i32
    return %arg0, %c0_i32, %c0_i32_0, %c0_i32_1 : i32, i32, i32, i32
  }
  func.func @transform_4(%arg0: i32) -> (i32, i32, i32, i32) {
    %c0_i32 = arith.constant 0 : i32
    %c0_i32_0 = arith.constant 0 : i32
    %c0_i32_1 = arith.constant 0 : i32
    %c0_i32_2 = arith.constant 0 : i32
    return %arg0, %c0_i32, %c0_i32_0, %c0_i32_1 : i32, i32, i32, i32
  }
}

module attributes {stable_mosaic.version = 11 : i64} {
  func.func @_post_kernel(%arg0: memref<16x32xf32, #tpu.memory_space<vmem>>, %arg1: memref<8x32xf32, #tpu.memory_space<vmem>>, %arg2: memref<8x32xf32, #tpu.memory_space<vmem>>, %arg3: memref<16x32xf32, #tpu.memory_space<vmem>>, %arg4: memref<8x16xf32, #tpu.memory_space<vmem>>, %arg5: memref<8x24xf32, #tpu.memory_space<vmem>>, %arg6: memref<32x32xbf16, #tpu.memory_space<vmem>>, %arg7: memref<32x16xbf16, #tpu.memory_space<vmem>>, %arg8: memref<32x24xbf16, #tpu.memory_space<vmem>>, %arg9: memref<1x32xf32, #tpu.memory_space<vmem>>, %arg10: memref<1x16xf32, #tpu.memory_space<vmem>>, %arg11: memref<1x24xf32, #tpu.memory_space<vmem>>, %arg12: memref<32x128xbf16, #tpu.memory_space<vmem>>, %arg13: memref<16x64xbf16, #tpu.memory_space<vmem>>, %arg14: memref<24x96xbf16, #tpu.memory_space<vmem>>, %arg15: memref<64x32xbf16, #tpu.memory_space<vmem>>, %arg16: memref<32x16xbf16, #tpu.memory_space<vmem>>, %arg17: memref<48x24xbf16, #tpu.memory_space<vmem>>, %arg18: memref<16x32xf32, #tpu.memory_space<vmem>>, %arg19: memref<8x16xf32, #tpu.memory_space<vmem>>, %arg20: memref<8x24xf32, #tpu.memory_space<vmem>>) attributes {dimension_semantics = [], scalar_prefetch = 0 : i64, scratch_operands = 0 : i64, tpu.core_type = #tpu.core_type<tc>} {
    %c0 = arith.constant 0 : index
    %c0_0 = arith.constant 0 : index
    %0 = vector.load %arg3[%c0, %c0_0] : memref<16x32xf32, #tpu.memory_space<vmem>>, vector<16x32xf32>
    %c0_1 = arith.constant 0 : index
    %c0_2 = arith.constant 0 : index
    %1 = vector.load %arg0[%c0_1, %c0_2] : memref<16x32xf32, #tpu.memory_space<vmem>>, vector<16x32xf32>
    %2 = arith.truncf %1 : vector<16x32xf32> to vector<16x32xbf16>
    %c0_3 = arith.constant 0 : index
    %c0_4 = arith.constant 0 : index
    %3 = vector.load %arg6[%c0_3, %c0_4] : memref<32x32xbf16, #tpu.memory_space<vmem>>, vector<32x32xbf16>
    %cst = arith.constant dense<0.000000e+00> : vector<16x32xf32>
    %4 = tpu.matmul %2, %3, %cst {dimension_numbers = #tpu.dot_dimension_numbers<[1], [0], [0], [1], [0, 0, 1, 1], [], []>} : vector<16x32xbf16>, vector<32x32xbf16>, vector<16x32xf32> -> vector<16x32xf32>
    %5 = arith.addf %0, %4 : vector<16x32xf32>
    %6 = arith.mulf %5, %5 : vector<16x32xf32>
    %cst_5 = arith.constant dense<0.000000e+00> : vector<16xf32>
    %7 = vector.multi_reduction <add>, %6, %cst_5 [1] : vector<16x32xf32> to vector<16xf32>
    %8 = vector.shape_cast %7 : vector<16xf32> to vector<16x1xf32>
    %cst_6 = arith.constant 3.200000e+01 : f32
    %9 = vector.broadcast %cst_6 : f32 to vector<16x1xf32>
    %10 = arith.divf %8, %9 : vector<16x1xf32>
    %cst_7 = arith.constant 9.99999997E-7 : f32
    %11 = vector.broadcast %cst_7 : f32 to vector<16x1xf32>
    %12 = arith.addf %10, %11 : vector<16x1xf32>
    %13 = math.rsqrt %12 : vector<16x1xf32>
    %14 = vector.broadcast %13 : vector<16x1xf32> to vector<16x32xf32>
    %15 = arith.mulf %5, %14 : vector<16x32xf32>
    %c0_8 = arith.constant 0 : index
    %c0_9 = arith.constant 0 : index
    %16 = vector.load %arg9[%c0_8, %c0_9] : memref<1x32xf32, #tpu.memory_space<vmem>>, vector<1x32xf32>
    %cst_10 = arith.constant 1.000000e+00 : f32
    %17 = vector.broadcast %cst_10 : f32 to vector<1x32xf32>
    %18 = arith.addf %17, %16 : vector<1x32xf32>
    %19 = vector.broadcast %18 : vector<1x32xf32> to vector<16x32xf32>
    %20 = arith.mulf %15, %19 : vector<16x32xf32>
    %21 = arith.truncf %20 : vector<16x32xf32> to vector<16x32xbf16>
    %c0_11 = arith.constant 0 : index
    %c0_12 = arith.constant 0 : index
    %22 = vector.load %arg12[%c0_11, %c0_12] : memref<32x128xbf16, #tpu.memory_space<vmem>>, vector<32x128xbf16>
    %cst_13 = arith.constant dense<0.000000e+00> : vector<16x128xf32>
    %23 = tpu.matmul %21, %22, %cst_13 {dimension_numbers = #tpu.dot_dimension_numbers<[1], [0], [0], [1], [0, 0, 1, 1], [], []>} : vector<16x32xbf16>, vector<32x128xbf16>, vector<16x128xf32> -> vector<16x128xf32>
    %24 = vector.extract_strided_slice %23 {offsets = [0, 0], sizes = [16, 64], strides = [1, 1]} : vector<16x128xf32> to vector<16x64xf32>
    %cst_14 = arith.constant 5.000000e-01 : f32
    %25 = vector.broadcast %cst_14 : f32 to vector<16x64xf32>
    %26 = arith.mulf %25, %24 : vector<16x64xf32>
    %cst_15 = arith.constant 4.471500e-02 : f32
    %27 = vector.broadcast %cst_15 : f32 to vector<16x64xf32>
    %28 = arith.mulf %27, %24 : vector<16x64xf32>
    %29 = arith.mulf %28, %24 : vector<16x64xf32>
    %30 = arith.mulf %29, %24 : vector<16x64xf32>
    %31 = arith.addf %24, %30 : vector<16x64xf32>
    %cst_16 = arith.constant 0.797884583 : f32
    %32 = vector.broadcast %cst_16 : f32 to vector<16x64xf32>
    %33 = arith.mulf %32, %31 : vector<16x64xf32>
    %34 = math.tanh %33 : vector<16x64xf32>
    %cst_17 = arith.constant 1.000000e+00 : f32
    %35 = vector.broadcast %cst_17 : f32 to vector<16x64xf32>
    %36 = arith.addf %35, %34 : vector<16x64xf32>
    %37 = arith.mulf %26, %36 : vector<16x64xf32>
    %38 = vector.extract_strided_slice %23 {offsets = [0, 64], sizes = [16, 64], strides = [1, 1]} : vector<16x128xf32> to vector<16x64xf32>
    %39 = arith.mulf %37, %38 : vector<16x64xf32>
    %40 = arith.truncf %39 : vector<16x64xf32> to vector<16x64xbf16>
    %c0_18 = arith.constant 0 : index
    %c0_19 = arith.constant 0 : index
    %41 = vector.load %arg15[%c0_18, %c0_19] : memref<64x32xbf16, #tpu.memory_space<vmem>>, vector<64x32xbf16>
    %cst_20 = arith.constant dense<0.000000e+00> : vector<16x32xf32>
    %42 = tpu.matmul %40, %41, %cst_20 {dimension_numbers = #tpu.dot_dimension_numbers<[1], [0], [0], [1], [0, 0, 1, 1], [], []>} : vector<16x64xbf16>, vector<64x32xbf16>, vector<16x32xf32> -> vector<16x32xf32>
    %43 = arith.addf %5, %42 : vector<16x32xf32>
    %c0_21 = arith.constant 0 : index
    %c0_22 = arith.constant 0 : index
    %44 = vector.load %arg18[%c0_21, %c0_22] : memref<16x32xf32, #tpu.memory_space<vmem>>, vector<16x32xf32>
    tpu.vector_store %arg18[%c0_21, %c0_22], %43 {strides = array<i32>} : memref<16x32xf32, #tpu.memory_space<vmem>>, vector<16x32xf32>,
    %c0_23 = arith.constant 0 : index
    %c0_24 = arith.constant 0 : index
    %45 = vector.load %arg4[%c0_23, %c0_24] : memref<8x16xf32, #tpu.memory_space<vmem>>, vector<8x16xf32>
    %c0_25 = arith.constant 0 : index
    %c0_26 = arith.constant 0 : index
    %46 = vector.load %arg1[%c0_25, %c0_26] : memref<8x32xf32, #tpu.memory_space<vmem>>, vector<8x32xf32>
    %47 = arith.truncf %46 : vector<8x32xf32> to vector<8x32xbf16>
    %c0_27 = arith.constant 0 : index
    %c0_28 = arith.constant 0 : index
    %48 = vector.load %arg7[%c0_27, %c0_28] : memref<32x16xbf16, #tpu.memory_space<vmem>>, vector<32x16xbf16>
    %cst_29 = arith.constant dense<0.000000e+00> : vector<8x16xf32>
    %49 = tpu.matmul %47, %48, %cst_29 {dimension_numbers = #tpu.dot_dimension_numbers<[1], [0], [0], [1], [0, 0, 1, 1], [], []>} : vector<8x32xbf16>, vector<32x16xbf16>, vector<8x16xf32> -> vector<8x16xf32>
    %50 = arith.addf %45, %49 : vector<8x16xf32>
    %51 = arith.mulf %50, %50 : vector<8x16xf32>
    %cst_30 = arith.constant dense<0.000000e+00> : vector<8xf32>
    %52 = vector.multi_reduction <add>, %51, %cst_30 [1] : vector<8x16xf32> to vector<8xf32>
    %53 = vector.shape_cast %52 : vector<8xf32> to vector<8x1xf32>
    %cst_31 = arith.constant 1.600000e+01 : f32
    %54 = vector.broadcast %cst_31 : f32 to vector<8x1xf32>
    %55 = arith.divf %53, %54 : vector<8x1xf32>
    %cst_32 = arith.constant 9.99999997E-7 : f32
    %56 = vector.broadcast %cst_32 : f32 to vector<8x1xf32>
    %57 = arith.addf %55, %56 : vector<8x1xf32>
    %58 = math.rsqrt %57 : vector<8x1xf32>
    %59 = vector.broadcast %58 : vector<8x1xf32> to vector<8x16xf32>
    %60 = arith.mulf %50, %59 : vector<8x16xf32>
    %c0_33 = arith.constant 0 : index
    %c0_34 = arith.constant 0 : index
    %61 = vector.load %arg10[%c0_33, %c0_34] : memref<1x16xf32, #tpu.memory_space<vmem>>, vector<1x16xf32>
    %cst_35 = arith.constant 1.000000e+00 : f32
    %62 = vector.broadcast %cst_35 : f32 to vector<1x16xf32>
    %63 = arith.addf %62, %61 : vector<1x16xf32>
    %64 = vector.broadcast %63 : vector<1x16xf32> to vector<8x16xf32>
    %65 = arith.mulf %60, %64 : vector<8x16xf32>
    %66 = arith.truncf %65 : vector<8x16xf32> to vector<8x16xbf16>
    %c0_36 = arith.constant 0 : index
    %c0_37 = arith.constant 0 : index
    %67 = vector.load %arg13[%c0_36, %c0_37] : memref<16x64xbf16, #tpu.memory_space<vmem>>, vector<16x64xbf16>
    %cst_38 = arith.constant dense<0.000000e+00> : vector<8x64xf32>
    %68 = tpu.matmul %66, %67, %cst_38 {dimension_numbers = #tpu.dot_dimension_numbers<[1], [0], [0], [1], [0, 0, 1, 1], [], []>} : vector<8x16xbf16>, vector<16x64xbf16>, vector<8x64xf32> -> vector<8x64xf32>
    %69 = vector.extract_strided_slice %68 {offsets = [0, 0], sizes = [8, 32], strides = [1, 1]} : vector<8x64xf32> to vector<8x32xf32>
    %cst_39 = arith.constant 5.000000e-01 : f32
    %70 = vector.broadcast %cst_39 : f32 to vector<8x32xf32>
    %71 = arith.mulf %70, %69 : vector<8x32xf32>
    %cst_40 = arith.constant 4.471500e-02 : f32
    %72 = vector.broadcast %cst_40 : f32 to vector<8x32xf32>
    %73 = arith.mulf %72, %69 : vector<8x32xf32>
    %74 = arith.mulf %73, %69 : vector<8x32xf32>
    %75 = arith.mulf %74, %69 : vector<8x32xf32>
    %76 = arith.addf %69, %75 : vector<8x32xf32>
    %cst_41 = arith.constant 0.797884583 : f32
    %77 = vector.broadcast %cst_41 : f32 to vector<8x32xf32>
    %78 = arith.mulf %77, %76 : vector<8x32xf32>
    %79 = math.tanh %78 : vector<8x32xf32>
    %cst_42 = arith.constant 1.000000e+00 : f32
    %80 = vector.broadcast %cst_42 : f32 to vector<8x32xf32>
    %81 = arith.addf %80, %79 : vector<8x32xf32>
    %82 = arith.mulf %71, %81 : vector<8x32xf32>
    %83 = vector.extract_strided_slice %68 {offsets = [0, 32], sizes = [8, 32], strides = [1, 1]} : vector<8x64xf32> to vector<8x32xf32>
    %84 = arith.mulf %82, %83 : vector<8x32xf32>
    %85 = arith.truncf %84 : vector<8x32xf32> to vector<8x32xbf16>
    %c0_43 = arith.constant 0 : index
    %c0_44 = arith.constant 0 : index
    %86 = vector.load %arg16[%c0_43, %c0_44] : memref<32x16xbf16, #tpu.memory_space<vmem>>, vector<32x16xbf16>
    %cst_45 = arith.constant dense<0.000000e+00> : vector<8x16xf32>
    %87 = tpu.matmul %85, %86, %cst_45 {dimension_numbers = #tpu.dot_dimension_numbers<[1], [0], [0], [1], [0, 0, 1, 1], [], []>} : vector<8x32xbf16>, vector<32x16xbf16>, vector<8x16xf32> -> vector<8x16xf32>
    %88 = arith.addf %50, %87 : vector<8x16xf32>
    %c0_46 = arith.constant 0 : index
    %c0_47 = arith.constant 0 : index
    %89 = vector.load %arg19[%c0_46, %c0_47] : memref<8x16xf32, #tpu.memory_space<vmem>>, vector<8x16xf32>
    tpu.vector_store %arg19[%c0_46, %c0_47], %88 {strides = array<i32>} : memref<8x16xf32, #tpu.memory_space<vmem>>, vector<8x16xf32>,
    %c0_48 = arith.constant 0 : index
    %c0_49 = arith.constant 0 : index
    %90 = vector.load %arg5[%c0_48, %c0_49] : memref<8x24xf32, #tpu.memory_space<vmem>>, vector<8x24xf32>
    %c0_50 = arith.constant 0 : index
    %c0_51 = arith.constant 0 : index
    %91 = vector.load %arg2[%c0_50, %c0_51] : memref<8x32xf32, #tpu.memory_space<vmem>>, vector<8x32xf32>
    %92 = arith.truncf %91 : vector<8x32xf32> to vector<8x32xbf16>
    %c0_52 = arith.constant 0 : index
    %c0_53 = arith.constant 0 : index
    %93 = vector.load %arg8[%c0_52, %c0_53] : memref<32x24xbf16, #tpu.memory_space<vmem>>, vector<32x24xbf16>
    %cst_54 = arith.constant dense<0.000000e+00> : vector<8x24xf32>
    %94 = tpu.matmul %92, %93, %cst_54 {dimension_numbers = #tpu.dot_dimension_numbers<[1], [0], [0], [1], [0, 0, 1, 1], [], []>} : vector<8x32xbf16>, vector<32x24xbf16>, vector<8x24xf32> -> vector<8x24xf32>
    %95 = arith.addf %90, %94 : vector<8x24xf32>
    %96 = arith.mulf %95, %95 : vector<8x24xf32>
    %cst_55 = arith.constant dense<0.000000e+00> : vector<8xf32>
    %97 = vector.multi_reduction <add>, %96, %cst_55 [1] : vector<8x24xf32> to vector<8xf32>
    %98 = vector.shape_cast %97 : vector<8xf32> to vector<8x1xf32>
    %cst_56 = arith.constant 2.400000e+01 : f32
    %99 = vector.broadcast %cst_56 : f32 to vector<8x1xf32>
    %100 = arith.divf %98, %99 : vector<8x1xf32>
    %cst_57 = arith.constant 9.99999997E-7 : f32
    %101 = vector.broadcast %cst_57 : f32 to vector<8x1xf32>
    %102 = arith.addf %100, %101 : vector<8x1xf32>
    %103 = math.rsqrt %102 : vector<8x1xf32>
    %104 = vector.broadcast %103 : vector<8x1xf32> to vector<8x24xf32>
    %105 = arith.mulf %95, %104 : vector<8x24xf32>
    %c0_58 = arith.constant 0 : index
    %c0_59 = arith.constant 0 : index
    %106 = vector.load %arg11[%c0_58, %c0_59] : memref<1x24xf32, #tpu.memory_space<vmem>>, vector<1x24xf32>
    %cst_60 = arith.constant 1.000000e+00 : f32
    %107 = vector.broadcast %cst_60 : f32 to vector<1x24xf32>
    %108 = arith.addf %107, %106 : vector<1x24xf32>
    %109 = vector.broadcast %108 : vector<1x24xf32> to vector<8x24xf32>
    %110 = arith.mulf %105, %109 : vector<8x24xf32>
    %111 = arith.truncf %110 : vector<8x24xf32> to vector<8x24xbf16>
    %c0_61 = arith.constant 0 : index
    %c0_62 = arith.constant 0 : index
    %112 = vector.load %arg14[%c0_61, %c0_62] : memref<24x96xbf16, #tpu.memory_space<vmem>>, vector<24x96xbf16>
    %cst_63 = arith.constant dense<0.000000e+00> : vector<8x96xf32>
    %113 = tpu.matmul %111, %112, %cst_63 {dimension_numbers = #tpu.dot_dimension_numbers<[1], [0], [0], [1], [0, 0, 1, 1], [], []>} : vector<8x24xbf16>, vector<24x96xbf16>, vector<8x96xf32> -> vector<8x96xf32>
    %114 = vector.extract_strided_slice %113 {offsets = [0, 0], sizes = [8, 48], strides = [1, 1]} : vector<8x96xf32> to vector<8x48xf32>
    %cst_64 = arith.constant 5.000000e-01 : f32
    %115 = vector.broadcast %cst_64 : f32 to vector<8x48xf32>
    %116 = arith.mulf %115, %114 : vector<8x48xf32>
    %cst_65 = arith.constant 4.471500e-02 : f32
    %117 = vector.broadcast %cst_65 : f32 to vector<8x48xf32>
    %118 = arith.mulf %117, %114 : vector<8x48xf32>
    %119 = arith.mulf %118, %114 : vector<8x48xf32>
    %120 = arith.mulf %119, %114 : vector<8x48xf32>
    %121 = arith.addf %114, %120 : vector<8x48xf32>
    %cst_66 = arith.constant 0.797884583 : f32
    %122 = vector.broadcast %cst_66 : f32 to vector<8x48xf32>
    %123 = arith.mulf %122, %121 : vector<8x48xf32>
    %124 = math.tanh %123 : vector<8x48xf32>
    %cst_67 = arith.constant 1.000000e+00 : f32
    %125 = vector.broadcast %cst_67 : f32 to vector<8x48xf32>
    %126 = arith.addf %125, %124 : vector<8x48xf32>
    %127 = arith.mulf %116, %126 : vector<8x48xf32>
    %128 = vector.extract_strided_slice %113 {offsets = [0, 48], sizes = [8, 48], strides = [1, 1]} : vector<8x96xf32> to vector<8x48xf32>
    %129 = arith.mulf %127, %128 : vector<8x48xf32>
    %130 = arith.truncf %129 : vector<8x48xf32> to vector<8x48xbf16>
    %c0_68 = arith.constant 0 : index
    %c0_69 = arith.constant 0 : index
    %131 = vector.load %arg17[%c0_68, %c0_69] : memref<48x24xbf16, #tpu.memory_space<vmem>>, vector<48x24xbf16>
    %cst_70 = arith.constant dense<0.000000e+00> : vector<8x24xf32>
    %132 = tpu.matmul %130, %131, %cst_70 {dimension_numbers = #tpu.dot_dimension_numbers<[1], [0], [0], [1], [0, 0, 1, 1], [], []>} : vector<8x48xbf16>, vector<48x24xbf16>, vector<8x24xf32> -> vector<8x24xf32>
    %133 = arith.addf %95, %132 : vector<8x24xf32>
    %c0_71 = arith.constant 0 : index
    %c0_72 = arith.constant 0 : index
    %134 = vector.load %arg20[%c0_71, %c0_72] : memref<8x24xf32, #tpu.memory_space<vmem>>, vector<8x24xf32>
    tpu.vector_store %arg20[%c0_71, %c0_72], %133 {strides = array<i32>} : memref<8x24xf32, #tpu.memory_space<vmem>>, vector<8x24xf32>,
    return
  }
}

</mosaic_0001>

<llo_original>
// kernel: joint_decoder_layer_pallas.3
$region0: #{joint_decoder_layer_pallas.3}
  #allocation0 [shape = 'u32[]', space=smem, size = 0x4, offset = 0x4, fixed_abs, tag = 'smem constant byte address 0x4 - core index']
  #allocation1 [shape = 'u32[144,128]{1,0:T(1,128)}', space=vmem, size = 0x12000, scoped, tag = 'internal scratch']
  %s0 = inlined_call_operand.vmem [shape: f32[16,32], index: 0, kind: input, shape index: {}]
  %s1 = inlined_call_operand.vmem [shape: f32[8,16], index: 1, kind: input, shape index: {}]
  %s2 = inlined_call_operand.vmem [shape: f32[8,24], index: 2, kind: input, shape index: {}]
  %s3 = inlined_call_operand.vmem [shape: f32[1,32], index: 3, kind: input, shape index: {}]
  %s4 = inlined_call_operand.vmem [shape: f32[1,16], index: 4, kind: input, shape index: {}]
  %s5 = inlined_call_operand.vmem [shape: f32[1,24], index: 5, kind: input, shape index: {}]
  %s6 = inlined_call_operand.vmem [shape: bf16[32,64], index: 6, kind: input, shape index: {}]
  %s7 = inlined_call_operand.vmem [shape: bf16[16,64], index: 7, kind: input, shape index: {}]
  %s8 = inlined_call_operand.vmem [shape: bf16[24,64], index: 8, kind: input, shape index: {}]
  %s9 = inlined_call_operand.vmem [shape: f32[16,64], index: 9, kind: output, shape index: {0}]
  %s10 = inlined_call_operand.vmem [shape: f32[8,64], index: 10, kind: output, shape index: {1}]
  %s11 = inlined_call_operand.vmem [shape: f32[8,64], index: 11, kind: output, shape index: {2}]
  %12 = xla_tuple %s9, %s10, %s11
  %s13 = sld [smem:[#allocation0]]
  $region62: #{joint_decoder_layer_pallas.3} parent=0
    _
  %s15 = ssub.s32 1, %s13
  %s16 = scalar_select 0, %s15, %s13
  // Predicated region
  $region2: #{joint_decoder_layer_pallas.3} parent=0 // pred_check
    _
  $region3: #{joint_decoder_layer_pallas.3} parent=0 // pred_check_branch
    %18 = sbr.rel (0) target = $region5
  $region4: #{joint_decoder_layer_pallas.3} parent=0 // pred_region
    _
  $region5: #{joint_decoder_layer_pallas.3} parent=0 // pred_fallthru
    _
  // Predicated region
  $region6: #{joint_decoder_layer_pallas.3} parent=0 // pred_check
    _
  $region7: #{joint_decoder_layer_pallas.3} parent=0 // pred_check_branch
    %20 = sbr.rel (0) target = $region9
  $region8: #{joint_decoder_layer_pallas.3} parent=0 // pred_region
    _
  $region9: #{joint_decoder_layer_pallas.3} parent=0 // pred_fallthru
    _
  // Predicated region
  $region10: #{joint_decoder_layer_pallas.3} parent=0 // pred_check
    _
  $region11: #{joint_decoder_layer_pallas.3} parent=0 // pred_check_branch
    %22 = sbr.rel (0) target = $region13
  $region12: #{joint_decoder_layer_pallas.3} parent=0 // pred_region
    _
  $region13: #{joint_decoder_layer_pallas.3} parent=0 // pred_fallthru
    _
  // Predicated region
  $region14: #{joint_decoder_layer_pallas.3} parent=0 // pred_check
    _
  $region15: #{joint_decoder_layer_pallas.3} parent=0 // pred_check_branch
    %24 = sbr.rel (0) target = $region17
  $region16: #{joint_decoder_layer_pallas.3} parent=0 // pred_region
    _
  $region17: #{joint_decoder_layer_pallas.3} parent=0 // pred_fallthru
    _
  // Predicated region
  $region18: #{joint_decoder_layer_pallas.3} parent=0 // pred_check
    _
  $region19: #{joint_decoder_layer_pallas.3} parent=0 // pred_check_branch
    %26 = sbr.rel (0) target = $region21
  $region20: #{joint_decoder_layer_pallas.3} parent=0 // pred_region
    _
  $region21: #{joint_decoder_layer_pallas.3} parent=0 // pred_fallthru
    _
  // Predicated region
  $region22: #{joint_decoder_layer_pallas.3} parent=0 // pred_check
    _
  $region23: #{joint_decoder_layer_pallas.3} parent=0 // pred_check_branch
    %28 = sbr.rel (0) target = $region25
  $region24: #{joint_decoder_layer_pallas.3} parent=0 // pred_region
    _
  $region25: #{joint_decoder_layer_pallas.3} parent=0 // pred_fallthru
    _
  // Predicated region
  $region26: #{joint_decoder_layer_pallas.3} parent=0 // pred_check
    _
  $region27: #{joint_decoder_layer_pallas.3} parent=0 // pred_check_branch
    %30 = sbr.rel (0) target = $region29
  $region28: #{joint_decoder_layer_pallas.3} parent=0 // pred_region
    _
  $region29: #{joint_decoder_layer_pallas.3} parent=0 // pred_fallthru
    _
  // Predicated region
  $region30: #{joint_decoder_layer_pallas.3} parent=0 // pred_check
    _
  $region31: #{joint_decoder_layer_pallas.3} parent=0 // pred_check_branch
    %32 = sbr.rel (0) target = $region33
  $region32: #{joint_decoder_layer_pallas.3} parent=0 // pred_region
    _
  $region33: #{joint_decoder_layer_pallas.3} parent=0 // pred_fallthru
    _
  // Predicated region
  $region34: #{joint_decoder_layer_pallas.3} parent=0 // pred_check
    _
  $region35: #{joint_decoder_layer_pallas.3} parent=0 // pred_check_branch
    %34 = sbr.rel (0) target = $region37
  $region36: #{joint_decoder_layer_pallas.3} parent=0 // pred_region
    _
  $region37: #{joint_decoder_layer_pallas.3} parent=0 // pred_fallthru
    _
  %v36 = vld [vmem:[%s0] sm:$0xff]
  %v37 = vld [vmem:[%s0 + $0x8] sm:$0xff]
  %v38 = vmul.f32 %v36, %v36
  %v39 = vmul.f32 %v37, %v37
  %vm40 = vcmask 261120
  %v41 = vsel %vm40, %v38, 0.0
  %42 = vadd.xlane.f32.xlu0 %v41
  %v43 = vpop.xlane.xlu0 %42
  %v44 = vsel %vm40, %v39, 0.0
  %45 = vadd.xlane.f32.xlu0 %v44
  %v46 = vpop.xlane.xlu0 %45
  %v47 = vrcp.pop 32.0
  %v48 = vmul.f32 %v43, %v47
  %v49 = vmul.f32 %v46, %v47
  %v50 = vadd.f32 %v48, 1e-06
  %v51 = vadd.f32 %v49, 1e-06
  %v52 = vrsqrt.pop %v50
  %v53 = vrsqrt.pop %v51
  %v54 = vmul.f32 %v36, %v52
  %v55 = vmul.f32 %v37, %v53
  %v56 = vld [vmem:[%s3] sm:$0x1]
  %v57 = vadd.f32 %v56, 1.0
  %v59 = vlaneseq
  %v60 = vshrl.u32 %v59, 7
  %v61 = vsub.s32 0, %v60
  %v62 = vrot.slane %v57, %v61
  %v64 = vmul.f32 %v54, %v62
  %v65 = vmul.f32 %v55, %v62
  %v66 = vpack.c.bf16 %v65, %v64
  %v67 = vld [vmem:[%s6] sm:$0xf]
  %v68 = vld [vmem:[%s6 + $0x4] sm:$0xf]
  %v69 = vld [vmem:[%s6 + $0x8] sm:$0xf]
  %v70 = vld [vmem:[%s6 + $0xc] sm:$0xf]
  %v75 = vunpack.c.l.b16 %v67
  %v76 = vunpack.c.l.b16 %v68
  %v77 = vunpack.c.l.b16 %v69
  %v78 = vunpack.c.l.b16 %v70
  %v79 = vpack.c.b16 %v76, %v75
  %v80 = vpack.c.b16 %v78, %v77
  %v84 = vsel %vm40, %v66, 0
  %86 = vmatprep.subr.bf16.mxu0 0
  %87 = vmatpush1.bf16.msra.mxu0 %v79
  %88 = vmatprep.subr.bf16.mxu0 0
  %89 = vmatpush1.bf16.msra.mxu0 %v80
  %90 = vmatprep.subr.bf16.mxu0 0
  %91 = vmatpush1.bf16.msra.mxu0 0
  %92 = vmatprep.subr.bf16.mxu0 0
  %93 = vmatpush1.bf16.msra.mxu0 0
  %94 = vmatprep.subr.bf16.mxu0 0
  %95 = vmatpush1.bf16.msra.mxu0 0
  %96 = vmatprep.subr.bf16.mxu0 0
  %97 = vmatpush1.bf16.msra.mxu0 0
  %98 = vmatprep.subr.bf16.mxu0 0
  %99 = vmatpush1.bf16.msra.mxu0 0
  %100 = vmatprep.subr.bf16.mxu0 0
  %101 = vmatpush1.bf16.msra.mxu0 0
  %102 = vmatprep.subr.bf16.mxu0 0
  %103 = vmatpush1.bf16.msra.mxu0 0
  %104 = vmatprep.subr.bf16.mxu0 0
  %105 = vmatpush1.bf16.msra.mxu0 0
  %106 = vmatprep.subr.bf16.mxu0 0
  %107 = vmatpush1.bf16.msra.mxu0 0
  %108 = vmatprep.subr.bf16.mxu0 0
  %109 = vmatpush1.bf16.msra.mxu0 0
  %110 = vmatprep.subr.bf16.mxu0 0
  %111 = vmatpush1.bf16.msra.mxu0 0
  %112 = vmatprep.subr.bf16.mxu0 0
  %113 = vmatpush1.bf16.msra.mxu0 0
  %114 = vmatprep.subr.bf16.mxu0 0
  %115 = vmatpush1.bf16.msra.mxu0 0
  %116 = vmatprep.subr.bf16.mxu0 0
  %117 = vmatpush1.bf16.msra.mxu0 0
  %118 = vmatprep.mubr.bf16.mxu0 0
  %119 = vmatmul.mubr.bf16.gmra.mrb[0].mxu0 %v84
  %v120 = vpop.f32.mrb[0].mxu0
  %v121 = vadd.f32 0.0, %v120
  %v122 = vpop.f32.mrb[0].mxu0
  %v123 = vpop.f32.mrb[0].mxu0
  %v124 = vadd.f32 0.0, %v123
  %v125 = vpop.f32.mrb[0].mxu0
  %126 = vdwg.mxu0
  %vm127 = vcmask 523264
  %128 = vst.msk [vmem:[%s9] sm:$0xff] %vm127, %v121
  %129 = vst.msk [vmem:[%s9 + $0x8] sm:$0xff] %vm127, %v124
  %v130 = vld [vmem:[%s1] sm:$0xff]
  %v131 = vmul.f32 %v130, %v130
  %vm132 = vcmask 130048
  %v133 = vsel %vm132, %v131, 0.0
  %134 = vadd.xlane.f32.xlu0 %v133
  %v135 = vpop.xlane.xlu0 %134
  %v136 = vrcp.pop 16.0
  %v137 = vmul.f32 %v135, %v136
  %v138 = vadd.f32 %v137, 1e-06
  %v139 = vrsqrt.pop %v138
  %v140 = vmul.f32 %v130, %v139
  %v141 = vld [vmem:[%s4] sm:$0x1]
  %v142 = vadd.f32 %v141, 1.0
  %v144 = vlaneseq
  %v145 = vshrl.u32 %v144, 7
  %v146 = vsub.s32 0, %v145
  %v147 = vrot.slane %v142, %v146
  %v149 = vmul.f32 %v140, %v147
  %v150 = vpack.c.bf16 %v149, %v149
  %v151 = vld [vmem:[%s7] sm:$0xf]
  %v152 = vld [vmem:[%s7 + $0x4] sm:$0xf]
  %v155 = vunpack.c.l.b16 %v151
  %v156 = vunpack.c.l.b16 %v152
  %v157 = vpack.c.b16 %v156, %v155
  %v160 = vsel %vm132, %v150, 0
  %162 = vmatprep.subr.bf16.mxu0 0
  %163 = vmatpush1.bf16.msra.mxu0 %v157
  %164 = vmatprep.subr.bf16.mxu0 0
  %165 = vmatpush1.bf16.msra.mxu0 0
  %166 = vmatprep.subr.bf16.mxu0 0
  %167 = vmatpush1.bf16.msra.mxu0 0
  %168 = vmatprep.subr.bf16.mxu0 0
  %169 = vmatpush1.bf16.msra.mxu0 0
  %170 = vmatprep.subr.bf16.mxu0 0
  %171 = vmatpush1.bf16.msra.mxu0 0
  %172 = vmatprep.subr.bf16.mxu0 0
  %173 = vmatpush1.bf16.msra.mxu0 0
  %174 = vmatprep.subr.bf16.mxu0 0
  %175 = vmatpush1.bf16.msra.mxu0 0
  %176 = vmatprep.subr.bf16.mxu0 0
  %177 = vmatpush1.bf16.msra.mxu0 0
  %178 = vmatprep.subr.bf16.mxu0 0
  %179 = vmatpush1.bf16.msra.mxu0 0
  %180 = vmatprep.subr.bf16.mxu0 0
  %181 = vmatpush1.bf16.msra.mxu0 0
  %182 = vmatprep.subr.bf16.mxu0 0
  %183 = vmatpush1.bf16.msra.mxu0 0
  %184 = vmatprep.subr.bf16.mxu0 0
  %185 = vmatpush1.bf16.msra.mxu0 0
  %186 = vmatprep.subr.bf16.mxu0 0
  %187 = vmatpush1.bf16.msra.mxu0 0
  %188 = vmatprep.subr.bf16.mxu0 0
  %189 = vmatpush1.bf16.msra.mxu0 0
  %190 = vmatprep.subr.bf16.mxu0 0
  %191 = vmatpush1.bf16.msra.mxu0 0
  %192 = vmatprep.subr.bf16.mxu0 0
  %193 = vmatpush1.bf16.msra.mxu0 0
  %194 = vmatprep.mubr.bf16.mxu0 0
  %195 = vmatmul.mubr.bf16.gmra.mrb[0].mxu0 %v160
  %v196 = vpop.f32.mrb[0].mxu0
  %v197 = vadd.f32 0.0, %v196
  %v198 = vpop.f32.mrb[0].mxu0
  %v199 = vpop.f32.mrb[0].mxu0
  %v200 = vpop.f32.mrb[0].mxu0
  %201 = vdwg.mxu0
  %202 = vst.msk [vmem:[%s10] sm:$0xff] %vm127, %v197
  %v203 = vld [vmem:[%s2] sm:$0xff]
  %v204 = vmul.f32 %v203, %v203
  %vm205 = vcmask 195584
  %v206 = vsel %vm205, %v204, 0.0
  %207 = vadd.xlane.f32.xlu0 %v206
  %v208 = vpop.xlane.xlu0 %207
  %v209 = vrcp.pop 24.0
  %v210 = vmul.f32 %v208, %v209
  %v211 = vadd.f32 %v210, 1e-06
  %v212 = vrsqrt.pop %v211
  %v213 = vmul.f32 %v203, %v212
  %v214 = vld [vmem:[%s5] sm:$0x1]
  %v215 = vadd.f32 %v214, 1.0
  %v217 = vlaneseq
  %v218 = vshrl.u32 %v217, 7
  %v219 = vsub.s32 0, %v218
  %v220 = vrot.slane %v215, %v219
  %v222 = vmul.f32 %v213, %v220
  %v223 = vpack.c.bf16 %v222, %v222
  %v224 = vld [vmem:[%s8] sm:$0xf]
  %v225 = vld [vmem:[%s8 + $0x4] sm:$0xf]
  %v226 = vld [vmem:[%s8 + $0x8] sm:$0xf]
  %v230 = vunpack.c.l.b16 %v224
  %v231 = vunpack.c.l.b16 %v225
  %v232 = vunpack.c.l.b16 %v226
  %v233 = vpack.c.b16 %v231, %v230
  %v234 = vpack.c.b16 %v232, %v232
  %v237 = vsel %vm205, %v223, 0
  %vm239 = vcmask 1043456
  %v241 = vsel %vm239, %v234, 0
  %243 = vmatprep.subr.bf16.mxu0 0
  %244 = vmatpush1.bf16.msra.mxu0 %v233
  %245 = vmatprep.subr.bf16.mxu0 0
  %246 = vmatpush1.bf16.msra.mxu0 %v241
  %247 = vmatprep.subr.bf16.mxu0 0
  %248 = vmatpush1.bf16.msra.mxu0 0
  %249 = vmatprep.subr.bf16.mxu0 0
  %250 = vmatpush1.bf16.msra.mxu0 0
  %251 = vmatprep.subr.bf16.mxu0 0
  %252 = vmatpush1.bf16.msra.mxu0 0
  %253 = vmatprep.subr.bf16.mxu0 0
  %254 = vmatpush1.bf16.msra.mxu0 0
  %255 = vmatprep.subr.bf16.mxu0 0
  %256 = vmatpush1.bf16.msra.mxu0 0
  %257 = vmatprep.subr.bf16.mxu0 0
  %258 = vmatpush1.bf16.msra.mxu0 0
  %259 = vmatprep.subr.bf16.mxu0 0
  %260 = vmatpush1.bf16.msra.mxu0 0
  %261 = vmatprep.subr.bf16.mxu0 0
  %262 = vmatpush1.bf16.msra.mxu0 0
  %263 = vmatprep.subr.bf16.mxu0 0
  %264 = vmatpush1.bf16.msra.mxu0 0
  %265 = vmatprep.subr.bf16.mxu0 0
  %266 = vmatpush1.bf16.msra.mxu0 0
  %267 = vmatprep.subr.bf16.mxu0 0
  %268 = vmatpush1.bf16.msra.mxu0 0
  %269 = vmatprep.subr.bf16.mxu0 0
  %270 = vmatpush1.bf16.msra.mxu0 0
  %271 = vmatprep.subr.bf16.mxu0 0
  %272 = vmatpush1.bf16.msra.mxu0 0
  %273 = vmatprep.subr.bf16.mxu0 0
  %274 = vmatpush1.bf16.msra.mxu0 0
  %275 = vmatprep.mubr.bf16.mxu0 0
  %276 = vmatmul.mubr.bf16.gmra.mrb[0].mxu0 %v237
  %v277 = vpop.f32.mrb[0].mxu0
  %v278 = vadd.f32 0.0, %v277
  %v279 = vpop.f32.mrb[0].mxu0
  %v280 = vpop.f32.mrb[0].mxu0
  %v281 = vpop.f32.mrb[0].mxu0
  %282 = vdwg.mxu0
  %283 = vst.msk [vmem:[%s11] sm:$0xff] %vm127, %v278
  // Predicated region
  $region38: #{joint_decoder_layer_pallas.3} parent=0 // pred_check
    _
  $region39: #{joint_decoder_layer_pallas.3} parent=0 // pred_check_branch
    %285 = sbr.rel (0) target = $region41
  $region40: #{joint_decoder_layer_pallas.3} parent=0 // pred_region
    _
  $region41: #{joint_decoder_layer_pallas.3} parent=0 // pred_fallthru
    _
  // Predicated region
  $region42: #{joint_decoder_layer_pallas.3} parent=0 // pred_check
    _
  $region43: #{joint_decoder_layer_pallas.3} parent=0 // pred_check_branch
    %287 = sbr.rel (0) target = $region45
  $region44: #{joint_decoder_layer_pallas.3} parent=0 // pred_region
    _
  $region45: #{joint_decoder_layer_pallas.3} parent=0 // pred_fallthru
    _
  // Predicated region
  $region46: #{joint_decoder_layer_pallas.3} parent=0 // pred_check
    _
  $region47: #{joint_decoder_layer_pallas.3} parent=0 // pred_check_branch
    %289 = sbr.rel (0) target = $region49
  $region48: #{joint_decoder_layer_pallas.3} parent=0 // pred_region
    _
  $region49: #{joint_decoder_layer_pallas.3} parent=0 // pred_fallthru
    _
  // Predicated region
  $region50: #{joint_decoder_layer_pallas.3} parent=0 // pred_check
    _
  $region51: #{joint_decoder_layer_pallas.3} parent=0 // pred_check_branch
    %291 = sbr.rel (0) target = $region53
  $region52: #{joint_decoder_layer_pallas.3} parent=0 // pred_region
    _
  $region53: #{joint_decoder_layer_pallas.3} parent=0 // pred_fallthru
    _
  // Predicated region
  $region54: #{joint_decoder_layer_pallas.3} parent=0 // pred_check
    _
  $region55: #{joint_decoder_layer_pallas.3} parent=0 // pred_check_branch
    %293 = sbr.rel (0) target = $region57
  $region56: #{joint_decoder_layer_pallas.3} parent=0 // pred_region
    _
  $region57: #{joint_decoder_layer_pallas.3} parent=0 // pred_fallthru
    _
  // Predicated region
  $region58: #{joint_decoder_layer_pallas.3} parent=0 // pred_check
    _
  $region59: #{joint_decoder_layer_pallas.3} parent=0 // pred_check_branch
    %295 = sbr.rel (0) target = $region61
  $region60: #{joint_decoder_layer_pallas.3} parent=0 // pred_region
    _
  $region61: #{joint_decoder_layer_pallas.3} parent=0 // pred_fallthru
    _

// kernel: joint_decoder_layer_pallas.4
$region0: #{joint_decoder_layer_pallas.4}
  #allocation0 [shape = 'u32[]', space=smem, size = 0x4, offset = 0x4, fixed_abs, tag = 'smem constant byte address 0x4 - core index']
  #allocation1 [shape = 'u32[144,128]{1,0:T(1,128)}', space=vmem, size = 0x12000, scoped, tag = 'internal scratch']
  %s0 = inlined_call_operand.vmem [shape: f32[2,4,16,8], index: 0, kind: input, shape index: {}]
  %s1 = inlined_call_operand.vmem [shape: f32[2,2,16,8], index: 1, kind: input, shape index: {}]
  %s2 = inlined_call_operand.vmem [shape: f32[2,2,16,8], index: 2, kind: input, shape index: {}]
  %s3 = inlined_call_operand.vmem [shape: f32[2,1,16,16], index: 3, kind: input, shape index: {}]
  %s4 = inlined_call_operand.vmem [shape: f32[2,4,16,8], index: 4, kind: output, shape index: {}]
  %s5 = sld [smem:[#allocation0]]
  $region49: #{joint_decoder_layer_pallas.4} parent=0
    _
  %s7 = ssub.s32 1, %s5
  %s8 = scalar_select 0, %s7, %s5
  loop: start=0, step=1, limit=4
  $region2: #{joint_decoder_layer_pallas.4} parent=0 // loop_pre_header
    _
  $region3: #{joint_decoder_layer_pallas.4} parent=0 // loop_header
    %s10 = sphi 0, %s14
    %p11 = scmp.ge.s32.totalorder %s10, 4
    %s20 = sphi 0, %s22
    %s23 = sphi 0, %s20
    %s24 = sphi 0, %s23
    %s40 = sphi 0, %s24
    %s46 = sphi 0, %s48
    %s49 = sphi 0, %s46
    %s50 = sphi 0, %s49
    %s66 = sphi 0, %s50
    %s72 = sphi 0, %s74
    %s75 = sphi 0, %s72
    %s76 = sphi 0, %s75
    %s92 = sphi 0, %s76
    %s98 = sphi 0, %s100
    %s101 = sphi 0, %s98
    %s102 = sphi 0, %s101
    %s118 = sphi 0, %s102
    %s124 = sphi 0, %s126
    %s127 = sphi 0, %s124
    %s128 = sphi 0, %s127
    %s144 = sphi 0, %s128
  $region4: #{joint_decoder_layer_pallas.4} parent=0 // loop_header_branch
    %13 = sbr.rel (%p11) target = $region8
  $region5: #{joint_decoder_layer_pallas.4} parent=0 // loop_body
    %s15 = ssub.s32 %s10, 1
    %s16 = ssub.s32 %s10, 2
    %s17 = sadd.s32 %s10, 1
    %s18 = ssub.s32 %s10, %s17
    %p19 = scmp.eq.s32.totalorder %s18, 0
    %s21 = sadd.s32 %s20, 1
    %s22 = scalar_select %p19, %s20, %s21
    %p25 = pneg %p19
    %p26 = scmp.eq.s32.totalorder %s10, 1
    %p27 = por %p25, %p26
    %p28 = scmp.ne.s32.totalorder %s20, %s23
    %p29 = scmp.eq.s32.totalorder %s10, 0
    %p30 = por %p28, %p29
    %p31 = scmp.ne.s32.totalorder %s20, %s23
    %p32 = scmp.eq.s32.totalorder %s15, 1
    %p33 = por %p31, %p32
    %p34 = scmp.ne.s32.totalorder %s23, %s24
    %p35 = scmp.eq.s32.totalorder %s15, 0
    %p36 = por %p34, %p35
    %p37 = scmp.ne.s32.totalorder %s23, %s24
    %p38 = scmp.eq.s32.totalorder %s16, 1
    %p39 = por %p37, %p38
    %p41 = scmp.ne.s32.totalorder %s24, %s40
    %p42 = scmp.eq.s32.totalorder %s16, 0
    %p43 = por %p41, %p42
    %s44 = ssub.s32 %s10, %s17
    %p45 = scmp.eq.s32.totalorder %s44, 0
    %s47 = sadd.s32 %s46, 1
    %s48 = scalar_select %p45, %s46, %s47
    %p51 = pneg %p45
    %p52 = scmp.eq.s32.totalorder %s10, 1
    %p53 = por %p51, %p52
    %p54 = scmp.ne.s32.totalorder %s46, %s49
    %p55 = scmp.eq.s32.totalorder %s10, 0
    %p56 = por %p54, %p55
    %p57 = scmp.ne.s32.totalorder %s46, %s49
    %p58 = scmp.eq.s32.totalorder %s15, 1
    %p59 = por %p57, %p58
    %p60 = scmp.ne.s32.totalorder %s49, %s50
    %p61 = scmp.eq.s32.totalorder %s15, 0
    %p62 = por %p60, %p61
    %p63 = scmp.ne.s32.totalorder %s49, %s50
    %p64 = scmp.eq.s32.totalorder %s16, 1
    %p65 = por %p63, %p64
    %p67 = scmp.ne.s32.totalorder %s50, %s66
    %p68 = scmp.eq.s32.totalorder %s16, 0
    %p69 = por %p67, %p68
    %s70 = ssub.s32 %s10, %s17
    %p71 = scmp.eq.s32.totalorder %s70, 0
    %s73 = sadd.s32 %s72, 1
    %s74 = scalar_select %p71, %s72, %s73
    %p77 = pneg %p71
    %p78 = scmp.eq.s32.totalorder %s10, 1
    %p79 = por %p77, %p78
    %p80 = scmp.ne.s32.totalorder %s72, %s75
    %p81 = scmp.eq.s32.totalorder %s10, 0
    %p82 = por %p80, %p81
    %p83 = scmp.ne.s32.totalorder %s72, %s75
    %p84 = scmp.eq.s32.totalorder %s15, 1
    %p85 = por %p83, %p84
    %p86 = scmp.ne.s32.totalorder %s75, %s76
    %p87 = scmp.eq.s32.totalorder %s15, 0
    %p88 = por %p86, %p87
    %p89 = scmp.ne.s32.totalorder %s75, %s76
    %p90 = scmp.eq.s32.totalorder %s16, 1
    %p91 = por %p89, %p90
    %p93 = scmp.ne.s32.totalorder %s76, %s92
    %p94 = scmp.eq.s32.totalorder %s16, 0
    %p95 = por %p93, %p94
    %s96 = ssub.s32 %s10, %s17
    %p97 = scmp.eq.s32.totalorder %s96, 0
    %s99 = sadd.s32 %s98, 1
    %s100 = scalar_select %p97, %s98, %s99
    %p103 = pneg %p97
    %p104 = scmp.eq.s32.totalorder %s10, 1
    %p105 = por %p103, %p104
    %p106 = scmp.ne.s32.totalorder %s98, %s101
    %p107 = scmp.eq.s32.totalorder %s10, 0
    %p108 = por %p106, %p107
    %p109 = scmp.ne.s32.totalorder %s98, %s101
    %p110 = scmp.eq.s32.totalorder %s15, 1
    %p111 = por %p109, %p110
    %p112 = scmp.ne.s32.totalorder %s101, %s102
    %p113 = scmp.eq.s32.totalorder %s15, 0
    %p114 = por %p112, %p113
    %p115 = scmp.ne.s32.totalorder %s101, %s102
    %p116 = scmp.eq.s32.totalorder %s16, 1
    %p117 = por %p115, %p116
    %p119 = scmp.ne.s32.totalorder %s102, %s118
    %p120 = scmp.eq.s32.totalorder %s16, 0
    %p121 = por %p119, %p120
    %s122 = ssub.s32 %s10, %s17
    %p123 = scmp.eq.s32.totalorder %s122, 0
    %s125 = sadd.s32 %s124, 1
    %s126 = scalar_select %p123, %s124, %s125
    %p129 = pneg %p123
    %p130 = scmp.eq.s32.totalorder %s10, 1
    %p131 = por %p129, %p130
    %p132 = scmp.ne.s32.totalorder %s124, %s127
    %p133 = scmp.eq.s32.totalorder %s10, 0
    %p134 = por %p132, %p133
    %p135 = scmp.ne.s32.totalorder %s124, %s127
    %p136 = scmp.eq.s32.totalorder %s15, 1
    %p137 = por %p135, %p136
    %p138 = scmp.ne.s32.totalorder %s127, %s128
    %p139 = scmp.eq.s32.totalorder %s15, 0
    %p140 = por %p138, %p139
    %p141 = scmp.ne.s32.totalorder %s127, %s128
    %p142 = scmp.eq.s32.totalorder %s16, 1
    %p143 = por %p141, %p142
    %p145 = scmp.ne.s32.totalorder %s128, %s144
    %p146 = scmp.eq.s32.totalorder %s16, 0
    %p147 = por %p145, %p146
    %p148 = scmp.le.s32.totalorder 1, %s10
    %p149 = scmp.lt.s32.totalorder %s10, 3
    %p150 = pnand %p148, %p149
    %p151 = pneg %p150
    // Predicated region
    $region9: #{joint_decoder_layer_pallas.4} parent=5 // pred_check
      _
    $region10: #{joint_decoder_layer_pallas.4} parent=5 // pred_check_branch
      %153 = sbr.rel (%p150) target = $region12
    $region11: #{joint_decoder_layer_pallas.4} parent=5 // pred_region
      %s154 = ssub.s32 %s10, 1
    $region12: #{joint_decoder_layer_pallas.4} parent=5 // pred_fallthru
      _
    %p155 = scmp.lt.s32.totalorder %s10, 2
    // Predicated region
    $region13: #{joint_decoder_layer_pallas.4} parent=5 // pred_check
      %p156 = pneg %p155
    $region14: #{joint_decoder_layer_pallas.4} parent=5 // pred_check_branch
      %158 = sbr.rel (%p156) target = $region16
    $region15: #{joint_decoder_layer_pallas.4} parent=5 // pred_region
      // Predicated region
      $region17: #{joint_decoder_layer_pallas.4} parent=15 // pred_check
        %p159 = pneg %p30
      $region18: #{joint_decoder_layer_pallas.4} parent=15 // pred_check_branch
        %161 = sbr.rel (%p159) target = $region20
      $region19: #{joint_decoder_layer_pallas.4} parent=15 // pred_region
        %p162 = scmp.lt.s32.totalorder %s10, 1
        %s163 = scalar_select %p162, %s10, 1
        %s164 = smul.addr %s163, 8
        %s165 = smul.addr %s164, 8
        %s166 = scalar_lea.vmem %s0, %s165
      $region20: #{joint_decoder_layer_pallas.4} parent=15 // pred_fallthru
        _
      // Predicated region
      $region21: #{joint_decoder_layer_pallas.4} parent=15 // pred_check
        %p167 = pneg %p56
      $region22: #{joint_decoder_layer_pallas.4} parent=15 // pred_check_branch
        %169 = sbr.rel (%p167) target = $region24
      $region23: #{joint_decoder_layer_pallas.4} parent=15 // pred_region
        %p170 = scmp.lt.s32.totalorder %s10, 1
        %s171 = scalar_select %p170, %s10, 1
        %s172 = smul.addr %s171, 4
        %s173 = smul.addr %s172, 8
        %s174 = scalar_lea.vmem %s1, %s173
      $region24: #{joint_decoder_layer_pallas.4} parent=15 // pred_fallthru
        _
      // Predicated region
      $region25: #{joint_decoder_layer_pallas.4} parent=15 // pred_check
        %p175 = pneg %p82
      $region26: #{joint_decoder_layer_pallas.4} parent=15 // pred_check_branch
        %177 = sbr.rel (%p175) target = $region28
      $region27: #{joint_decoder_layer_pallas.4} parent=15 // pred_region
        %p178 = scmp.lt.s32.totalorder %s10, 1
        %s179 = scalar_select %p178, %s10, 1
        %s180 = smul.addr %s179, 4
        %s181 = smul.addr %s180, 8
        %s182 = scalar_lea.vmem %s2, %s181
      $region28: #{joint_decoder_layer_pallas.4} parent=15 // pred_fallthru
        _
      // Predicated region
      $region29: #{joint_decoder_layer_pallas.4} parent=15 // pred_check
        %p183 = pneg %p108
      $region30: #{joint_decoder_layer_pallas.4} parent=15 // pred_check_branch
        %185 = sbr.rel (%p183) target = $region32
      $region31: #{joint_decoder_layer_pallas.4} parent=15 // pred_region
        %p186 = scmp.lt.s32.totalorder %s10, 1
        %s187 = scalar_select %p186, %s10, 1
        %s188 = smul.addr %s187, 2
        %s189 = smul.addr %s188, 8
        %s190 = scalar_lea.vmem %s3, %s189
      $region32: #{joint_decoder_layer_pallas.4} parent=15 // pred_fallthru
        _
    $region16: #{joint_decoder_layer_pallas.4} parent=5 // pred_fallthru
      _
    %p191 = scmp.le.s32.totalorder 1, %s10
    %p192 = scmp.lt.s32.totalorder %s10, 3
    %p193 = pnand %p191, %p192
    %p194 = pneg %p193
    // Predicated region
    $region33: #{joint_decoder_layer_pallas.4} parent=5 // pred_check
      _
    $region34: #{joint_decoder_layer_pallas.4} parent=5 // pred_check_branch
      %196 = sbr.rel (%p193) target = $region36
    $region35: #{joint_decoder_layer_pallas.4} parent=5 // pred_region
      %s197 = ssub.s32 %s10, 1
      %p198 = scmp.lt.s32.totalorder %s15, 1
      %s199 = scalar_select %p198, %s15, 1
      %s200 = smul.addr %s199, 8
      %s201 = smul.addr %s200, 8
      %s202 = scalar_lea.vmem %s0, %s201
      %p203 = pneg %p36
      %p204 = pneg %p33
      %p205 = scmp.lt.s32.totalorder %s15, 1
      %s206 = scalar_select %p205, %s15, 1
      %s207 = smul.addr %s206, 4
      %s208 = smul.addr %s207, 8
      %s209 = scalar_lea.vmem %s1, %s208
      %p210 = pneg %p62
      %p211 = pneg %p59
      %p212 = scmp.lt.s32.totalorder %s15, 1
      %s213 = scalar_select %p212, %s15, 1
      %s214 = smul.addr %s213, 4
      %s215 = smul.addr %s214, 8
      %s216 = scalar_lea.vmem %s2, %s215
      %p217 = pneg %p88
      %p218 = pneg %p85
      %p219 = scmp.lt.s32.totalorder %s15, 1
      %s220 = scalar_select %p219, %s15, 1
      %s221 = smul.addr %s220, 2
      %s222 = smul.addr %s221, 8
      %s223 = scalar_lea.vmem %s3, %s222
      %p224 = pneg %p114
      %p225 = pneg %p111
      %p226 = pneg %p140
      %p227 = pneg %p137
      %p228 = scmp.lt.s32.totalorder %s15, 1
      %s229 = scalar_select %p228, %s15, 1
      %s230 = smul.addr %s229, 8
      %s231 = smul.addr %s230, 8
      %s232 = scalar_lea.vmem %s4, %s231
      %p233 = scmp.lt.s32.totalorder %s15, 1
      %s234 = scalar_select %p233, %s15, 1
      %s235 = smul.addr %s234, 8
      %s236 = smul.addr %s235, 8
      %s237 = scalar_lea.vmem %s0, %s236
      %p238 = scmp.lt.s32.totalorder %s15, 1
      %s239 = scalar_select %p238, %s15, 1
      %s240 = smul.addr %s239, 4
      %s241 = smul.addr %s240, 8
      %s242 = scalar_lea.vmem %s1, %s241
      %p243 = scmp.lt.s32.totalorder %s15, 1
      %s244 = scalar_select %p243, %s15, 1
      %s245 = smul.addr %s244, 4
      %s246 = smul.addr %s245, 8
      %s247 = scalar_lea.vmem %s2, %s246
      %p248 = scmp.lt.s32.totalorder %s15, 1
      %s249 = scalar_select %p248, %s15, 1
      %s250 = smul.addr %s249, 2
      %s251 = smul.addr %s250, 8
      %s252 = scalar_lea.vmem %s3, %s251
      %p253 = scmp.lt.s32.totalorder %s15, 1
      %s254 = scalar_select %p253, %s15, 1
      %s255 = smul.addr %s254, 8
      %s256 = smul.addr %s255, 8
      %s257 = scalar_lea.vmem %s4, %s256
      %v259 = vld [vmem:[%s237] sm:$0xff]
      %v260 = vld [vmem:[%s237 + $0x8] sm:$0xff]
      %v261 = vld [vmem:[%s237 + $0x10] sm:$0xff]
      %v262 = vld [vmem:[%s237 + $0x18] sm:$0xff]
      %v263 = vld [vmem:[%s237 + $0x20] sm:$0xff]
      %v264 = vld [vmem:[%s237 + $0x28] sm:$0xff]
      %v265 = vld [vmem:[%s237 + $0x30] sm:$0xff]
      %v266 = vld [vmem:[%s237 + $0x38] sm:$0xff]
      %v267 = vld [vmem:[%s242] sm:$0xff]
      %v268 = vld [vmem:[%s242 + $0x8] sm:$0xff]
      %v269 = vld [vmem:[%s242 + $0x10] sm:$0xff]
      %v270 = vld [vmem:[%s242 + $0x18] sm:$0xff]
      %v271 = vld [vmem:[%s247] sm:$0xff]
      %v272 = vld [vmem:[%s247 + $0x8] sm:$0xff]
      %v273 = vld [vmem:[%s247 + $0x10] sm:$0xff]
      %v274 = vld [vmem:[%s247 + $0x18] sm:$0xff]
      %v275 = vld [vmem:[%s252] sm:$0xff]
      %v276 = vld [vmem:[%s252 + $0x8] sm:$0xff]
      %v277 = vpack.c.bf16 %v260, %v259
      %v278 = vpack.c.bf16 %v262, %v261
      %v279 = vpack.c.bf16 %v264, %v263
      %v280 = vpack.c.bf16 %v266, %v265
      %v281 = vpack.c.bf16 %v268, %v267
      %v282 = vpack.c.bf16 %v270, %v269
      %vm283 = vcmask 64512
      %v285 = vsel %vm283, %v277, 0
      %v288 = vsel %vm283, %v281, 0
      %290 = vmatprep.subr.bf16.mxu0 0
      %291 = vmatpush1.bf16.xpose.msra.mxu0 %v288
      %292 = vmatprep.subr.bf16.mxu0 0
      %293 = vmatpush1.bf16.xpose.msra.mxu0 0
      %294 = vmatprep.subr.bf16.mxu0 0
      %295 = vmatpush1.bf16.xpose.msra.mxu0 0
      %296 = vmatprep.subr.bf16.mxu0 0
      %297 = vmatpush1.bf16.xpose.msra.mxu0 0
      %298 = vmatprep.subr.bf16.mxu0 0
      %299 = vmatpush1.bf16.xpose.msra.mxu0 0
      %300 = vmatprep.subr.bf16.mxu0 0
      %301 = vmatpush1.bf16.xpose.msra.mxu0 0
      %302 = vmatprep.subr.bf16.mxu0 0
      %303 = vmatpush1.bf16.xpose.msra.mxu0 0
      %304 = vmatprep.subr.bf16.mxu0 0
      %305 = vmatpush1.bf16.xpose.msra.mxu0 0
      %306 = vmatprep.subr.bf16.mxu0 0
      %307 = vmatpush1.bf16.xpose.msra.mxu0 0
      %308 = vmatprep.subr.bf16.mxu0 0
      %309 = vmatpush1.bf16.xpose.msra.mxu0 0
      %310 = vmatprep.subr.bf16.mxu0 0
      %311 = vmatpush1.bf16.xpose.msra.mxu0 0
      %312 = vmatprep.subr.bf16.mxu0 0
      %313 = vmatpush1.bf16.xpose.msra.mxu0 0
      %314 = vmatprep.subr.bf16.mxu0 0
      %315 = vmatpush1.bf16.xpose.msra.mxu0 0
      %316 = vmatprep.subr.bf16.mxu0 0
      %317 = vmatpush1.bf16.xpose.msra.mxu0 0
      %318 = vmatprep.subr.bf16.mxu0 0
      %319 = vmatpush1.bf16.xpose.msra.mxu0 0
      %320 = vmatprep.subr.bf16.mxu0 0
      %321 = vmatpush1.bf16.xpose.msra.mxu0 0
      %322 = vmatprep.mubr.bf16.mxu0 0
      %323 = vmatmul.mubr.bf16.gmra.mrb[0].mxu0 %v285
      %v324 = vpop.f32.mrb[0].mxu0
      %v325 = vadd.f32 0.0, %v324
      %v326 = vpop.f32.mrb[0].mxu0
      %v327 = vpop.f32.mrb[0].mxu0
      %v328 = vadd.f32 0.0, %v327
      %v329 = vpop.f32.mrb[0].mxu0
      %330 = vdwg.mxu0
      %v332 = vsel %vm283, %v278, 0
      %334 = vmatprep.subr.bf16.mxu0 0
      %335 = vmatpush1.bf16.xpose.msra.mxu0 %v288
      %336 = vmatprep.subr.bf16.mxu0 0
      %337 = vmatpush1.bf16.xpose.msra.mxu0 0
      %338 = vmatprep.subr.bf16.mxu0 0
      %339 = vmatpush1.bf16.xpose.msra.mxu0 0
      %340 = vmatprep.subr.bf16.mxu0 0
      %341 = vmatpush1.bf16.xpose.msra.mxu0 0
      %342 = vmatprep.subr.bf16.mxu0 0
      %343 = vmatpush1.bf16.xpose.msra.mxu0 0
      %344 = vmatprep.subr.bf16.mxu0 0
      %345 = vmatpush1.bf16.xpose.msra.mxu0 0
      %346 = vmatprep.subr.bf16.mxu0 0
      %347 = vmatpush1.bf16.xpose.msra.mxu0 0
      %348 = vmatprep.subr.bf16.mxu0 0
      %349 = vmatpush1.bf16.xpose.msra.mxu0 0
      %350 = vmatprep.subr.bf16.mxu0 0
      %351 = vmatpush1.bf16.xpose.msra.mxu0 0
      %352 = vmatprep.subr.bf16.mxu0 0
      %353 = vmatpush1.bf16.xpose.msra.mxu0 0
      %354 = vmatprep.subr.bf16.mxu0 0
      %355 = vmatpush1.bf16.xpose.msra.mxu0 0
      %356 = vmatprep.subr.bf16.mxu0 0
      %357 = vmatpush1.bf16.xpose.msra.mxu0 0
      %358 = vmatprep.subr.bf16.mxu0 0
      %359 = vmatpush1.bf16.xpose.msra.mxu0 0
      %360 = vmatprep.subr.bf16.mxu0 0
      %361 = vmatpush1.bf16.xpose.msra.mxu0 0
      %362 = vmatprep.subr.bf16.mxu0 0
      %363 = vmatpush1.bf16.xpose.msra.mxu0 0
      %364 = vmatprep.subr.bf16.mxu0 0
      %365 = vmatpush1.bf16.xpose.msra.mxu0 0
      %366 = vmatprep.mubr.bf16.mxu0 0
      %367 = vmatmul.mubr.bf16.gmra.mrb[0].mxu0 %v332
      %v368 = vpop.f32.mrb[0].mxu0
      %v369 = vadd.f32 0.0, %v368
      %v370 = vpop.f32.mrb[0].mxu0
      %v371 = vpop.f32.mrb[0].mxu0
      %v372 = vadd.f32 0.0, %v371
      %v373 = vpop.f32.mrb[0].mxu0
      %374 = vdwg.mxu0
      %v376 = vsel %vm283, %v279, 0
      %v379 = vsel %vm283, %v282, 0
      %381 = vmatprep.subr.bf16.mxu0 0
      %382 = vmatpush1.bf16.xpose.msra.mxu0 %v379
      %383 = vmatprep.subr.bf16.mxu0 0
      %384 = vmatpush1.bf16.xpose.msra.mxu0 0
      %385 = vmatprep.subr.bf16.mxu0 0
      %386 = vmatpush1.bf16.xpose.msra.mxu0 0
      %387 = vmatprep.subr.bf16.mxu0 0
      %388 = vmatpush1.bf16.xpose.msra.mxu0 0
      %389 = vmatprep.subr.bf16.mxu0 0
      %390 = vmatpush1.bf16.xpose.msra.mxu0 0
      %391 = vmatprep.subr.bf16.mxu0 0
      %392 = vmatpush1.bf16.xpose.msra.mxu0 0
      %393 = vmatprep.subr.bf16.mxu0 0
      %394 = vmatpush1.bf16.xpose.msra.mxu0 0
      %395 = vmatprep.subr.bf16.mxu0 0
      %396 = vmatpush1.bf16.xpose.msra.mxu0 0
      %397 = vmatprep.subr.bf16.mxu0 0
      %398 = vmatpush1.bf16.xpose.msra.mxu0 0
      %399 = vmatprep.subr.bf16.mxu0 0
      %400 = vmatpush1.bf16.xpose.msra.mxu0 0
      %401 = vmatprep.subr.bf16.mxu0 0
      %402 = vmatpush1.bf16.xpose.msra.mxu0 0
      %403 = vmatprep.subr.bf16.mxu0 0
      %404 = vmatpush1.bf16.xpose.msra.mxu0 0
      %405 = vmatprep.subr.bf16.mxu0 0
      %406 = vmatpush1.bf16.xpose.msra.mxu0 0
      %407 = vmatprep.subr.bf16.mxu0 0
      %408 = vmatpush1.bf16.xpose.msra.mxu0 0
      %409 = vmatprep.subr.bf16.mxu0 0
      %410 = vmatpush1.bf16.xpose.msra.mxu0 0
      %411 = vmatprep.subr.bf16.mxu0 0
      %412 = vmatpush1.bf16.xpose.msra.mxu0 0
      %413 = vmatprep.mubr.bf16.mxu0 0
      %414 = vmatmul.mubr.bf16.gmra.mrb[0].mxu0 %v376
      %v415 = vpop.f32.mrb[0].mxu0
      %v416 = vadd.f32 0.0, %v415
      %v417 = vpop.f32.mrb[0].mxu0
      %v418 = vpop.f32.mrb[0].mxu0
      %v419 = vadd.f32 0.0, %v418
      %v420 = vpop.f32.mrb[0].mxu0
      %421 = vdwg.mxu0
      %v423 = vsel %vm283, %v280, 0
      %425 = vmatprep.subr.bf16.mxu0 0
      %426 = vmatpush1.bf16.xpose.msra.mxu0 %v379
      %427 = vmatprep.subr.bf16.mxu0 0
      %428 = vmatpush1.bf16.xpose.msra.mxu0 0
      %429 = vmatprep.subr.bf16.mxu0 0
      %430 = vmatpush1.bf16.xpose.msra.mxu0 0
      %431 = vmatprep.subr.bf16.mxu0 0
      %432 = vmatpush1.bf16.xpose.msra.mxu0 0
      %433 = vmatprep.subr.bf16.mxu0 0
      %434 = vmatpush1.bf16.xpose.msra.mxu0 0
      %435 = vmatprep.subr.bf16.mxu0 0
      %436 = vmatpush1.bf16.xpose.msra.mxu0 0
      %437 = vmatprep.subr.bf16.mxu0 0
      %438 = vmatpush1.bf16.xpose.msra.mxu0 0
      %439 = vmatprep.subr.bf16.mxu0 0
      %440 = vmatpush1.bf16.xpose.msra.mxu0 0
      %441 = vmatprep.subr.bf16.mxu0 0
      %442 = vmatpush1.bf16.xpose.msra.mxu0 0
      %443 = vmatprep.subr.bf16.mxu0 0
      %444 = vmatpush1.bf16.xpose.msra.mxu0 0
      %445 = vmatprep.subr.bf16.mxu0 0
      %446 = vmatpush1.bf16.xpose.msra.mxu0 0
      %447 = vmatprep.subr.bf16.mxu0 0
      %448 = vmatpush1.bf16.xpose.msra.mxu0 0
      %449 = vmatprep.subr.bf16.mxu0 0
      %450 = vmatpush1.bf16.xpose.msra.mxu0 0
      %451 = vmatprep.subr.bf16.mxu0 0
      %452 = vmatpush1.bf16.xpose.msra.mxu0 0
      %453 = vmatprep.subr.bf16.mxu0 0
      %454 = vmatpush1.bf16.xpose.msra.mxu0 0
      %455 = vmatprep.subr.bf16.mxu0 0
      %456 = vmatpush1.bf16.xpose.msra.mxu0 0
      %457 = vmatprep.mubr.bf16.mxu0 0
      %458 = vmatmul.mubr.bf16.gmra.mrb[0].mxu0 %v423
      %v459 = vpop.f32.mrb[0].mxu0
      %v460 = vadd.f32 0.0, %v459
      %v461 = vpop.f32.mrb[0].mxu0
      %v462 = vpop.f32.mrb[0].mxu0
      %v463 = vadd.f32 0.0, %v462
      %v464 = vpop.f32.mrb[0].mxu0
      %465 = vdwg.mxu0
      %v466 = vmul.f32 %v325, 0.0070710676
      %v467 = vmul.f32 %v328, 0.0070710676
      %v468 = vmul.f32 %v369, 0.0070710676
      %v469 = vmul.f32 %v372, 0.0070710676
      %v470 = vmul.f32 %v416, 0.0070710676
      %v471 = vmul.f32 %v419, 0.0070710676
      %v472 = vmul.f32 %v460, 0.0070710676
      %v473 = vmul.f32 %v463, 0.0070710676
      %v474 = vtanh.pop %v466
      %v475 = vtanh.pop %v467
      %v476 = vtanh.pop %v468
      %v477 = vtanh.pop %v469
      %v478 = vtanh.pop %v470
      %v479 = vtanh.pop %v471
      %v480 = vtanh.pop %v472
      %v481 = vtanh.pop %v473
      %v482 = vmul.f32 %v474, 50.0
      %v483 = vmul.f32 %v475, 50.0
      %v484 = vmul.f32 %v476, 50.0
      %v485 = vmul.f32 %v477, 50.0
      %v486 = vmul.f32 %v478, 50.0
      %v487 = vmul.f32 %v479, 50.0
      %v488 = vmul.f32 %v480, 50.0
      %v489 = vmul.f32 %v481, 50.0
      %v490 = vadd.f32 %v482, %v275
      %v491 = vadd.f32 %v483, %v276
      %v492 = vadd.f32 %v484, %v275
      %v493 = vadd.f32 %v485, %v276
      %v494 = vadd.f32 %v486, %v275
      %v495 = vadd.f32 %v487, %v276
      %v496 = vadd.f32 %v488, %v275
      %v497 = vadd.f32 %v489, %v276
      %vm498 = vcmask 130048
      %v499 = vsel %vm498, %v490, -inf
      %500 = vmax.xlane.f32.xlu0 %v499
      %v501 = vpop.xlane.xlu0 %500
      %v502 = vsel %vm498, %v491, -inf
      %503 = vmax.xlane.f32.xlu0 %v502
      %v504 = vpop.xlane.xlu0 %503
      %v505 = vsel %vm498, %v492, -inf
      %506 = vmax.xlane.f32.xlu0 %v505
      %v507 = vpop.xlane.xlu0 %506
      %v508 = vsel %vm498, %v493, -inf
      %509 = vmax.xlane.f32.xlu0 %v508
      %v510 = vpop.xlane.xlu0 %509
      %v511 = vsel %vm498, %v494, -inf
      %512 = vmax.xlane.f32.xlu0 %v511
      %v513 = vpop.xlane.xlu0 %512
      %v514 = vsel %vm498, %v495, -inf
      %515 = vmax.xlane.f32.xlu0 %v514
      %v516 = vpop.xlane.xlu0 %515
      %v517 = vsel %vm498, %v496, -inf
      %518 = vmax.xlane.f32.xlu0 %v517
      %v519 = vpop.xlane.xlu0 %518
      %v520 = vsel %vm498, %v497, -inf
      %521 = vmax.xlane.f32.xlu0 %v520
      %v522 = vpop.xlane.xlu0 %521
      %v523 = vsub.f32 %v490, %v501
      %v524 = vsub.f32 %v491, %v504
      %v525 = vsub.f32 %v492, %v507
      %v526 = vsub.f32 %v493, %v510
      %v527 = vsub.f32 %v494, %v513
      %v528 = vsub.f32 %v495, %v516
      %v529 = vsub.f32 %v496, %v519
      %v530 = vsub.f32 %v497, %v522
      %v531 = vmul.f32 %v523, 1.442695
      %v532 = vpow.pop %v531
      %v533 = vmul.f32 %v524, 1.442695
      %v534 = vpow.pop %v533
      %v535 = vmul.f32 %v525, 1.442695
      %v536 = vpow.pop %v535
      %v537 = vmul.f32 %v526, 1.442695
      %v538 = vpow.pop %v537
      %v539 = vmul.f32 %v527, 1.442695
      %v540 = vpow.pop %v539
      %v541 = vmul.f32 %v528, 1.442695
      %v542 = vpow.pop %v541
      %v543 = vmul.f32 %v529, 1.442695
      %v544 = vpow.pop %v543
      %v545 = vmul.f32 %v530, 1.442695
      %v546 = vpow.pop %v545
      %v547 = vsel %vm498, %v532, 0.0
      %548 = vadd.xlane.f32.xlu0 %v547
      %v549 = vpop.xlane.xlu0 %548
      %v550 = vsel %vm498, %v534, 0.0
      %551 = vadd.xlane.f32.xlu0 %v550
      %v552 = vpop.xlane.xlu0 %551
      %v553 = vsel %vm498, %v536, 0.0
      %554 = vadd.xlane.f32.xlu0 %v553
      %v555 = vpop.xlane.xlu0 %554
      %v556 = vsel %vm498, %v538, 0.0
      %557 = vadd.xlane.f32.xlu0 %v556
      %v558 = vpop.xlane.xlu0 %557
      %v559 = vsel %vm498, %v540, 0.0
      %560 = vadd.xlane.f32.xlu0 %v559
      %v561 = vpop.xlane.xlu0 %560
      %v562 = vsel %vm498, %v542, 0.0
      %563 = vadd.xlane.f32.xlu0 %v562
      %v564 = vpop.xlane.xlu0 %563
      %v565 = vsel %vm498, %v544, 0.0
      %566 = vadd.xlane.f32.xlu0 %v565
      %v567 = vpop.xlane.xlu0 %566
      %v568 = vsel %vm498, %v546, 0.0
      %569 = vadd.xlane.f32.xlu0 %v568
      %v570 = vpop.xlane.xlu0 %569
      %v571 = vrcp.pop %v549
      %v572 = vrcp.pop %v552
      %v573 = vrcp.pop %v555
      %v574 = vrcp.pop %v558
      %v575 = vrcp.pop %v561
      %v576 = vrcp.pop %v564
      %v577 = vrcp.pop %v567
      %v578 = vrcp.pop %v570
      %v579 = vmul.f32 %v532, %v571
      %v580 = vmul.f32 %v534, %v572
      %v581 = vmul.f32 %v536, %v573
      %v582 = vmul.f32 %v538, %v574
      %v583 = vmul.f32 %v540, %v575
      %v584 = vmul.f32 %v542, %v576
      %v585 = vmul.f32 %v544, %v577
      %v586 = vmul.f32 %v546, %v578
      %v587 = vpack.c.bf16 %v580, %v579
      %v588 = vpack.c.bf16 %v582, %v581
      %v589 = vpack.c.bf16 %v584, %v583
      %v590 = vpack.c.bf16 %v586, %v585
      %v591 = vpack.c.bf16 %v272, %v271
      %v592 = vpack.c.bf16 %v274, %v273
      %v594 = vsel %vm498, %v587, 0
      %596 = vmatprep.subr.bf16.mxu0 0
      %597 = vmatpush1.bf16.msra.mxu0 %v591
      %598 = vmatprep.subr.bf16.mxu0 0
      %599 = vmatpush1.bf16.msra.mxu0 0
      %600 = vmatprep.subr.bf16.mxu0 0
      %601 = vmatpush1.bf16.msra.mxu0 0
      %602 = vmatprep.subr.bf16.mxu0 0
      %603 = vmatpush1.bf16.msra.mxu0 0
      %604 = vmatprep.subr.bf16.mxu0 0
      %605 = vmatpush1.bf16.msra.mxu0 0
      %606 = vmatprep.subr.bf16.mxu0 0
      %607 = vmatpush1.bf16.msra.mxu0 0
      %608 = vmatprep.subr.bf16.mxu0 0
      %609 = vmatpush1.bf16.msra.mxu0 0
      %610 = vmatprep.subr.bf16.mxu0 0
      %611 = vmatpush1.bf16.msra.mxu0 0
      %612 = vmatprep.subr.bf16.mxu0 0
      %613 = vmatpush1.bf16.msra.mxu0 0
      %614 = vmatprep.subr.bf16.mxu0 0
      %615 = vmatpush1.bf16.msra.mxu0 0
      %616 = vmatprep.subr.bf16.mxu0 0
      %617 = vmatpush1.bf16.msra.mxu0 0
      %618 = vmatprep.subr.bf16.mxu0 0
      %619 = vmatpush1.bf16.msra.mxu0 0
      %620 = vmatprep.subr.bf16.mxu0 0
      %621 = vmatpush1.bf16.msra.mxu0 0
      %622 = vmatprep.subr.bf16.mxu0 0
      %623 = vmatpush1.bf16.msra.mxu0 0
      %624 = vmatprep.subr.bf16.mxu0 0
      %625 = vmatpush1.bf16.msra.mxu0 0
      %626 = vmatprep.subr.bf16.mxu0 0
      %627 = vmatpush1.bf16.msra.mxu0 0
      %628 = vmatprep.mubr.bf16.mxu0 0
      %629 = vmatmul.mubr.bf16.gmra.mrb[0].mxu0 %v594
      %v630 = vpop.f32.mrb[0].mxu0
      %v631 = vadd.f32 0.0, %v630
      %v632 = vpop.f32.mrb[0].mxu0
      %v633 = vpop.f32.mrb[0].mxu0
      %v634 = vadd.f32 0.0, %v633
      %v635 = vpop.f32.mrb[0].mxu0
      %636 = vdwg.mxu0
      %v638 = vsel %vm498, %v588, 0
      %640 = vmatprep.subr.bf16.mxu0 0
      %641 = vmatpush1.bf16.msra.mxu0 %v591
      %642 = vmatprep.subr.bf16.mxu0 0
      %643 = vmatpush1.bf16.msra.mxu0 0
      %644 = vmatprep.subr.bf16.mxu0 0
      %645 = vmatpush1.bf16.msra.mxu0 0
      %646 = vmatprep.subr.bf16.mxu0 0
      %647 = vmatpush1.bf16.msra.mxu0 0
      %648 = vmatprep.subr.bf16.mxu0 0
      %649 = vmatpush1.bf16.msra.mxu0 0
      %650 = vmatprep.subr.bf16.mxu0 0
      %651 = vmatpush1.bf16.msra.mxu0 0
      %652 = vmatprep.subr.bf16.mxu0 0
      %653 = vmatpush1.bf16.msra.mxu0 0
      %654 = vmatprep.subr.bf16.mxu0 0
      %655 = vmatpush1.bf16.msra.mxu0 0
      %656 = vmatprep.subr.bf16.mxu0 0
      %657 = vmatpush1.bf16.msra.mxu0 0
      %658 = vmatprep.subr.bf16.mxu0 0
      %659 = vmatpush1.bf16.msra.mxu0 0
      %660 = vmatprep.subr.bf16.mxu0 0
      %661 = vmatpush1.bf16.msra.mxu0 0
      %662 = vmatprep.subr.bf16.mxu0 0
      %663 = vmatpush1.bf16.msra.mxu0 0
      %664 = vmatprep.subr.bf16.mxu0 0
      %665 = vmatpush1.bf16.msra.mxu0 0
      %666 = vmatprep.subr.bf16.mxu0 0
      %667 = vmatpush1.bf16.msra.mxu0 0
      %668 = vmatprep.subr.bf16.mxu0 0
      %669 = vmatpush1.bf16.msra.mxu0 0
      %670 = vmatprep.subr.bf16.mxu0 0
      %671 = vmatpush1.bf16.msra.mxu0 0
      %672 = vmatprep.mubr.bf16.mxu0 0
      %673 = vmatmul.mubr.bf16.gmra.mrb[0].mxu0 %v638
      %v674 = vpop.f32.mrb[0].mxu0
      %v675 = vadd.f32 0.0, %v674
      %v676 = vpop.f32.mrb[0].mxu0
      %v677 = vpop.f32.mrb[0].mxu0
      %v678 = vadd.f32 0.0, %v677
      %v679 = vpop.f32.mrb[0].mxu0
      %680 = vdwg.mxu0
      %v682 = vsel %vm498, %v589, 0
      %684 = vmatprep.subr.bf16.mxu0 0
      %685 = vmatpush1.bf16.msra.mxu0 %v592
      %686 = vmatprep.subr.bf16.mxu0 0
      %687 = vmatpush1.bf16.msra.mxu0 0
      %688 = vmatprep.subr.bf16.mxu0 0
      %689 = vmatpush1.bf16.msra.mxu0 0
      %690 = vmatprep.subr.bf16.mxu0 0
      %691 = vmatpush1.bf16.msra.mxu0 0
      %692 = vmatprep.subr.bf16.mxu0 0
      %693 = vmatpush1.bf16.msra.mxu0 0
      %694 = vmatprep.subr.bf16.mxu0 0
      %695 = vmatpush1.bf16.msra.mxu0 0
      %696 = vmatprep.subr.bf16.mxu0 0
      %697 = vmatpush1.bf16.msra.mxu0 0
      %698 = vmatprep.subr.bf16.mxu0 0
      %699 = vmatpush1.bf16.msra.mxu0 0
      %700 = vmatprep.subr.bf16.mxu0 0
      %701 = vmatpush1.bf16.msra.mxu0 0
      %702 = vmatprep.subr.bf16.mxu0 0
      %703 = vmatpush1.bf16.msra.mxu0 0
      %704 = vmatprep.subr.bf16.mxu0 0
      %705 = vmatpush1.bf16.msra.mxu0 0
      %706 = vmatprep.subr.bf16.mxu0 0
      %707 = vmatpush1.bf16.msra.mxu0 0
      %708 = vmatprep.subr.bf16.mxu0 0
      %709 = vmatpush1.bf16.msra.mxu0 0
      %710 = vmatprep.subr.bf16.mxu0 0
      %711 = vmatpush1.bf16.msra.mxu0 0
      %712 = vmatprep.subr.bf16.mxu0 0
      %713 = vmatpush1.bf16.msra.mxu0 0
      %714 = vmatprep.subr.bf16.mxu0 0
      %715 = vmatpush1.bf16.msra.mxu0 0
      %716 = vmatprep.mubr.bf16.mxu0 0
      %717 = vmatmul.mubr.bf16.gmra.mrb[0].mxu0 %v682
      %v718 = vpop.f32.mrb[0].mxu0
      %v719 = vadd.f32 0.0, %v718
      %v720 = vpop.f32.mrb[0].mxu0
      %v721 = vpop.f32.mrb[0].mxu0
      %v722 = vadd.f32 0.0, %v721
      %v723 = vpop.f32.mrb[0].mxu0
      %724 = vdwg.mxu0
      %v726 = vsel %vm498, %v590, 0
      %728 = vmatprep.subr.bf16.mxu0 0
      %729 = vmatpush1.bf16.msra.mxu0 %v592
      %730 = vmatprep.subr.bf16.mxu0 0
      %731 = vmatpush1.bf16.msra.mxu0 0
      %732 = vmatprep.subr.bf16.mxu0 0
      %733 = vmatpush1.bf16.msra.mxu0 0
      %734 = vmatprep.subr.bf16.mxu0 0
      %735 = vmatpush1.bf16.msra.mxu0 0
      %736 = vmatprep.subr.bf16.mxu0 0
      %737 = vmatpush1.bf16.msra.mxu0 0
      %738 = vmatprep.subr.bf16.mxu0 0
      %739 = vmatpush1.bf16.msra.mxu0 0
      %740 = vmatprep.subr.bf16.mxu0 0
      %741 = vmatpush1.bf16.msra.mxu0 0
      %742 = vmatprep.subr.bf16.mxu0 0
      %743 = vmatpush1.bf16.msra.mxu0 0
      %744 = vmatprep.subr.bf16.mxu0 0
      %745 = vmatpush1.bf16.msra.mxu0 0
      %746 = vmatprep.subr.bf16.mxu0 0
      %747 = vmatpush1.bf16.msra.mxu0 0
      %748 = vmatprep.subr.bf16.mxu0 0
      %749 = vmatpush1.bf16.msra.mxu0 0
      %750 = vmatprep.subr.bf16.mxu0 0
      %751 = vmatpush1.bf16.msra.mxu0 0
      %752 = vmatprep.subr.bf16.mxu0 0
      %753 = vmatpush1.bf16.msra.mxu0 0
      %754 = vmatprep.subr.bf16.mxu0 0
      %755 = vmatpush1.bf16.msra.mxu0 0
      %756 = vmatprep.subr.bf16.mxu0 0
      %757 = vmatpush1.bf16.msra.mxu0 0
      %758 = vmatprep.subr.bf16.mxu0 0
      %759 = vmatpush1.bf16.msra.mxu0 0
      %760 = vmatprep.mubr.bf16.mxu0 0
      %761 = vmatmul.mubr.bf16.gmra.mrb[0].mxu0 %v726
      %v762 = vpop.f32.mrb[0].mxu0
      %v763 = vadd.f32 0.0, %v762
      %v764 = vpop.f32.mrb[0].mxu0
      %v765 = vpop.f32.mrb[0].mxu0
      %v766 = vadd.f32 0.0, %v765
      %v767 = vpop.f32.mrb[0].mxu0
      %768 = vdwg.mxu0
      %769 = vst.msk [vmem:[%s257] sm:$0xff] %vm283, %v631
      %770 = vst.msk [vmem:[%s257 + $0x8] sm:$0xff] %vm283, %v634
      %771 = vst.msk [vmem:[%s257 + $0x10] sm:$0xff] %vm283, %v675
      %772 = vst.msk [vmem:[%s257 + $0x18] sm:$0xff] %vm283, %v678
      %773 = vst.msk [vmem:[%s257 + $0x20] sm:$0xff] %vm283, %v719
      %774 = vst.msk [vmem:[%s257 + $0x28] sm:$0xff] %vm283, %v722
      %775 = vst.msk [vmem:[%s257 + $0x30] sm:$0xff] %vm283, %v763
      %776 = vst.msk [vmem:[%s257 + $0x38] sm:$0xff] %vm283, %v766
      %p777 = scmp.lt.s32.totalorder %s15, 1
      %s778 = scalar_select %p777, %s15, 1
      %s779 = smul.addr %s778, 8
      %s780 = smul.addr %s779, 8
      %s781 = scalar_lea.vmem %s4, %s780
      // Predicated region
      $region37: #{joint_decoder_layer_pallas.4} parent=35 // pred_check
        %p782 = pneg %p137
      $region38: #{joint_decoder_layer_pallas.4} parent=35 // pred_check_branch
        %784 = sbr.rel (%p782) target = $region40
      $region39: #{joint_decoder_layer_pallas.4} parent=35 // pred_region
        _
      $region40: #{joint_decoder_layer_pallas.4} parent=35 // pred_fallthru
        _
    $region36: #{joint_decoder_layer_pallas.4} parent=5 // pred_fallthru
      _
    %p785 = scmp.le.s32.totalorder 2, %s10
    // Predicated region
    $region41: #{joint_decoder_layer_pallas.4} parent=5 // pred_check
      %p786 = pneg %p785
    $region42: #{joint_decoder_layer_pallas.4} parent=5 // pred_check_branch
      %788 = sbr.rel (%p786) target = $region44
    $region43: #{joint_decoder_layer_pallas.4} parent=5 // pred_region
      %s789 = ssub.s32 %s10, 2
      // Predicated region
      $region45: #{joint_decoder_layer_pallas.4} parent=43 // pred_check
        %p790 = pneg %p143
      $region46: #{joint_decoder_layer_pallas.4} parent=43 // pred_check_branch
        %792 = sbr.rel (%p790) target = $region48
      $region47: #{joint_decoder_layer_pallas.4} parent=43 // pred_region
        %p793 = scmp.lt.s32.totalorder %s16, 1
        %s794 = scalar_select %p793, %s16, 1
        %s795 = smul.addr %s794, 8
        %s796 = smul.addr %s795, 8
        %s797 = scalar_lea.vmem %s4, %s796
      $region48: #{joint_decoder_layer_pallas.4} parent=43 // pred_fallthru
        _
    $region44: #{joint_decoder_layer_pallas.4} parent=5 // pred_fallthru
      _
  $region6: #{joint_decoder_layer_pallas.4} parent=0 // loop_footer
    %s14 = sadd.s32 1, %s10
  $region7: #{joint_decoder_layer_pallas.4} parent=0 // loop_footer_branch
    %9 = sbr.rel target = $region3
  $region8: #{joint_decoder_layer_pallas.4} parent=0 // loop_exit
    _

// kernel: joint_decoder_layer_pallas.5
$region0: #{joint_decoder_layer_pallas.5}
  #allocation0 [shape = 'u32[]', space=smem, size = 0x4, offset = 0x4, fixed_abs, tag = 'smem constant byte address 0x4 - core index']
  #allocation1 [shape = 'u32[144,128]{1,0:T(1,128)}', space=vmem, size = 0x12000, scoped, tag = 'internal scratch']
  %s0 = inlined_call_operand.vmem [shape: f32[16,32], index: 0, kind: input, shape index: {}]
  %s1 = inlined_call_operand.vmem [shape: f32[8,32], index: 1, kind: input, shape index: {}]
  %s2 = inlined_call_operand.vmem [shape: f32[8,32], index: 2, kind: input, shape index: {}]
  %s3 = inlined_call_operand.vmem [shape: f32[16,32], index: 3, kind: input, shape index: {}]
  %s4 = inlined_call_operand.vmem [shape: f32[8,16], index: 4, kind: input, shape index: {}]
  %s5 = inlined_call_operand.vmem [shape: f32[8,24], index: 5, kind: input, shape index: {}]
  %s6 = inlined_call_operand.vmem [shape: bf16[32,32], index: 6, kind: input, shape index: {}]
  %s7 = inlined_call_operand.vmem [shape: bf16[32,16], index: 7, kind: input, shape index: {}]
  %s8 = inlined_call_operand.vmem [shape: bf16[32,24], index: 8, kind: input, shape index: {}]
  %s9 = inlined_call_operand.vmem [shape: f32[1,32], index: 9, kind: input, shape index: {}]
  %s10 = inlined_call_operand.vmem [shape: f32[1,16], index: 10, kind: input, shape index: {}]
  %s11 = inlined_call_operand.vmem [shape: f32[1,24], index: 11, kind: input, shape index: {}]
  %s12 = inlined_call_operand.vmem [shape: bf16[32,128], index: 12, kind: input, shape index: {}]
  %s13 = inlined_call_operand.vmem [shape: bf16[16,64], index: 13, kind: input, shape index: {}]
  %s14 = inlined_call_operand.vmem [shape: bf16[24,96], index: 14, kind: input, shape index: {}]
  %s15 = inlined_call_operand.vmem [shape: bf16[64,32], index: 15, kind: input, shape index: {}]
  %s16 = inlined_call_operand.vmem [shape: bf16[32,16], index: 16, kind: input, shape index: {}]
  %s17 = inlined_call_operand.vmem [shape: bf16[48,24], index: 17, kind: input, shape index: {}]
  %s18 = inlined_call_operand.hbm [shape: f32[16,32], index: 18, kind: output, shape index: {0}]
  %s19 = inlined_call_operand.hbm [shape: f32[8,16], index: 19, kind: output, shape index: {1}]
  %s20 = inlined_call_operand.hbm [shape: f32[8,24], index: 20, kind: output, shape index: {2}]
  %21 = xla_tuple %s18, %s19, %s20
  %s22 = sld [smem:[#allocation0]]
  $region98: #{joint_decoder_layer_pallas.5} parent=0
    _
  %s24 = ssub.s32 1, %s22
  %s25 = scalar_select 0, %s24, %s22
  $region1: #{joint_decoder_layer_pallas.5} parent=0
    #allocation2 [shape = 'u8[8192]{0}', space=vmem, size = 0x2000, scoped, tag = 'output window, operand 0, single buffered']
    #allocation3 [shape = 's32[1]{0}', space=sflag, size = 0x4, scoped, tag = 'scoped memory for joint_decoder_layer_pallas.5']
    #allocation4 [shape = 'u8[4096]{0}', space=vmem, size = 0x1000, scoped, tag = 'output window, operand 1, single buffered']
    #allocation5 [shape = 's32[1]{0}', space=sflag, size = 0x4, scoped, tag = 'scoped memory for joint_decoder_layer_pallas.5']
    #allocation6 [shape = 'u8[4096]{0}', space=vmem, size = 0x1000, scoped, tag = 'output window, operand 2, single buffered']
    %26 = vsyncpa [#allocation3], 0
    %27 = vsyncpa [#allocation5], 0
    // Predicated region
    $region2: #{joint_decoder_layer_pallas.5} parent=1 // pred_check
      _
    $region3: #{joint_decoder_layer_pallas.5} parent=1 // pred_check_branch
      %29 = sbr.rel (0) target = $region5
    $region4: #{joint_decoder_layer_pallas.5} parent=1 // pred_region
      _
    $region5: #{joint_decoder_layer_pallas.5} parent=1 // pred_fallthru
      _
    // Predicated region
    $region6: #{joint_decoder_layer_pallas.5} parent=1 // pred_check
      _
    $region7: #{joint_decoder_layer_pallas.5} parent=1 // pred_check_branch
      %31 = sbr.rel (0) target = $region9
    $region8: #{joint_decoder_layer_pallas.5} parent=1 // pred_region
      _
    $region9: #{joint_decoder_layer_pallas.5} parent=1 // pred_fallthru
      _
    // Predicated region
    $region10: #{joint_decoder_layer_pallas.5} parent=1 // pred_check
      _
    $region11: #{joint_decoder_layer_pallas.5} parent=1 // pred_check_branch
      %33 = sbr.rel (0) target = $region13
    $region12: #{joint_decoder_layer_pallas.5} parent=1 // pred_region
      _
    $region13: #{joint_decoder_layer_pallas.5} parent=1 // pred_fallthru
      _
    // Predicated region
    $region14: #{joint_decoder_layer_pallas.5} parent=1 // pred_check
      _
    $region15: #{joint_decoder_layer_pallas.5} parent=1 // pred_check_branch
      %35 = sbr.rel (0) target = $region17
    $region16: #{joint_decoder_layer_pallas.5} parent=1 // pred_region
      _
    $region17: #{joint_decoder_layer_pallas.5} parent=1 // pred_fallthru
      _
    // Predicated region
    $region18: #{joint_decoder_layer_pallas.5} parent=1 // pred_check
      _
    $region19: #{joint_decoder_layer_pallas.5} parent=1 // pred_check_branch
      %37 = sbr.rel (0) target = $region21
    $region20: #{joint_decoder_layer_pallas.5} parent=1 // pred_region
      _
    $region21: #{joint_decoder_layer_pallas.5} parent=1 // pred_fallthru
      _
    // Predicated region
    $region22: #{joint_decoder_layer_pallas.5} parent=1 // pred_check
      _
    $region23: #{joint_decoder_layer_pallas.5} parent=1 // pred_check_branch
      %39 = sbr.rel (0) target = $region25
    $region24: #{joint_decoder_layer_pallas.5} parent=1 // pred_region
      _
    $region25: #{joint_decoder_layer_pallas.5} parent=1 // pred_fallthru
      _
    // Predicated region
    $region26: #{joint_decoder_layer_pallas.5} parent=1 // pred_check
      _
    $region27: #{joint_decoder_layer_pallas.5} parent=1 // pred_check_branch
      %41 = sbr.rel (0) target = $region29
    $region28: #{joint_decoder_layer_pallas.5} parent=1 // pred_region
      _
    $region29: #{joint_decoder_layer_pallas.5} parent=1 // pred_fallthru
      _
    // Predicated region
    $region30: #{joint_decoder_layer_pallas.5} parent=1 // pred_check
      _
    $region31: #{joint_decoder_layer_pallas.5} parent=1 // pred_check_branch
      %43 = sbr.rel (0) target = $region33
    $region32: #{joint_decoder_layer_pallas.5} parent=1 // pred_region
      _
    $region33: #{joint_decoder_layer_pallas.5} parent=1 // pred_fallthru
      _
    // Predicated region
    $region34: #{joint_decoder_layer_pallas.5} parent=1 // pred_check
      _
    $region35: #{joint_decoder_layer_pallas.5} parent=1 // pred_check_branch
      %45 = sbr.rel (0) target = $region37
    $region36: #{joint_decoder_layer_pallas.5} parent=1 // pred_region
      _
    $region37: #{joint_decoder_layer_pallas.5} parent=1 // pred_fallthru
      _
    // Predicated region
    $region38: #{joint_decoder_layer_pallas.5} parent=1 // pred_check
      _
    $region39: #{joint_decoder_layer_pallas.5} parent=1 // pred_check_branch
      %47 = sbr.rel (0) target = $region41
    $region40: #{joint_decoder_layer_pallas.5} parent=1 // pred_region
      _
    $region41: #{joint_decoder_layer_pallas.5} parent=1 // pred_fallthru
      _
    // Predicated region
    $region42: #{joint_decoder_layer_pallas.5} parent=1 // pred_check
      _
    $region43: #{joint_decoder_layer_pallas.5} parent=1 // pred_check_branch
      %49 = sbr.rel (0) target = $region45
    $region44: #{joint_decoder_layer_pallas.5} parent=1 // pred_region
      _
    $region45: #{joint_decoder_layer_pallas.5} parent=1 // pred_fallthru
      _
    // Predicated region
    $region46: #{joint_decoder_layer_pallas.5} parent=1 // pred_check
      _
    $region47: #{joint_decoder_layer_pallas.5} parent=1 // pred_check_branch
      %51 = sbr.rel (0) target = $region49
    $region48: #{joint_decoder_layer_pallas.5} parent=1 // pred_region
      _
    $region49: #{joint_decoder_layer_pallas.5} parent=1 // pred_fallthru
      _
    // Predicated region
    $region50: #{joint_decoder_layer_pallas.5} parent=1 // pred_check
      _
    $region51: #{joint_decoder_layer_pallas.5} parent=1 // pred_check_branch
      %53 = sbr.rel (0) target = $region53
    $region52: #{joint_decoder_layer_pallas.5} parent=1 // pred_region
      _
    $region53: #{joint_decoder_layer_pallas.5} parent=1 // pred_fallthru
      _
    // Predicated region
    $region54: #{joint_decoder_layer_pallas.5} parent=1 // pred_check
      _
    $region55: #{joint_decoder_layer_pallas.5} parent=1 // pred_check_branch
      %55 = sbr.rel (0) target = $region57
    $region56: #{joint_decoder_layer_pallas.5} parent=1 // pred_region
      _
    $region57: #{joint_decoder_layer_pallas.5} parent=1 // pred_fallthru
      _
    // Predicated region
    $region58: #{joint_decoder_layer_pallas.5} parent=1 // pred_check
      _
    $region59: #{joint_decoder_layer_pallas.5} parent=1 // pred_check_branch
      %57 = sbr.rel (0) target = $region61
    $region60: #{joint_decoder_layer_pallas.5} parent=1 // pred_region
      _
    $region61: #{joint_decoder_layer_pallas.5} parent=1 // pred_fallthru
      _
    // Predicated region
    $region62: #{joint_decoder_layer_pallas.5} parent=1 // pred_check
      _
    $region63: #{joint_decoder_layer_pallas.5} parent=1 // pred_check_branch
      %59 = sbr.rel (0) target = $region65
    $region64: #{joint_decoder_layer_pallas.5} parent=1 // pred_region
      _
    $region65: #{joint_decoder_layer_pallas.5} parent=1 // pred_fallthru
      _
    // Predicated region
    $region66: #{joint_decoder_layer_pallas.5} parent=1 // pred_check
      _
    $region67: #{joint_decoder_layer_pallas.5} parent=1 // pred_check_branch
      %61 = sbr.rel (0) target = $region69
    $region68: #{joint_decoder_layer_pallas.5} parent=1 // pred_region
      _
    $region69: #{joint_decoder_layer_pallas.5} parent=1 // pred_fallthru
      _
    // Predicated region
    $region70: #{joint_decoder_layer_pallas.5} parent=1 // pred_check
      _
    $region71: #{joint_decoder_layer_pallas.5} parent=1 // pred_check_branch
      %63 = sbr.rel (0) target = $region73
    $region72: #{joint_decoder_layer_pallas.5} parent=1 // pred_region
      _
    $region73: #{joint_decoder_layer_pallas.5} parent=1 // pred_fallthru
      _
    %v65 = vld [vmem:[%s3] sm:$0xff]
    %v66 = vld [vmem:[%s3 + $0x8] sm:$0xff]
    %v67 = vld [vmem:[%s0] sm:$0xff]
    %v68 = vld [vmem:[%s0 + $0x8] sm:$0xff]
    %v69 = vpack.c.bf16 %v68, %v67
    %v70 = vld [vmem:[%s6] sm:$0xf]
    %v71 = vld [vmem:[%s6 + $0x4] sm:$0xf]
    %v72 = vld [vmem:[%s6 + $0x8] sm:$0xf]
    %v73 = vld [vmem:[%s6 + $0xc] sm:$0xf]
    %v78 = vunpack.c.l.b16 %v70
    %v79 = vunpack.c.l.b16 %v71
    %v80 = vunpack.c.l.b16 %v72
    %v81 = vunpack.c.l.b16 %v73
    %v82 = vpack.c.b16 %v79, %v78
    %v83 = vpack.c.b16 %v81, %v80
    %vm86 = vcmask 261120
    %v88 = vsel %vm86, %v69, 0
    %90 = vmatprep.subr.bf16.mxu0 0
    %91 = vmatpush1.bf16.msra.mxu0 %v82
    %92 = vmatprep.subr.bf16.mxu0 0
    %93 = vmatpush1.bf16.msra.mxu0 %v83
    %94 = vmatprep.subr.bf16.mxu0 0
    %95 = vmatpush1.bf16.msra.mxu0 0
    %96 = vmatprep.subr.bf16.mxu0 0
    %97 = vmatpush1.bf16.msra.mxu0 0
    %98 = vmatprep.subr.bf16.mxu0 0
    %99 = vmatpush1.bf16.msra.mxu0 0
    %100 = vmatprep.subr.bf16.mxu0 0
    %101 = vmatpush1.bf16.msra.mxu0 0
    %102 = vmatprep.subr.bf16.mxu0 0
    %103 = vmatpush1.bf16.msra.mxu0 0
    %104 = vmatprep.subr.bf16.mxu0 0
    %105 = vmatpush1.bf16.msra.mxu0 0
    %106 = vmatprep.subr.bf16.mxu0 0
    %107 = vmatpush1.bf16.msra.mxu0 0
    %108 = vmatprep.subr.bf16.mxu0 0
    %109 = vmatpush1.bf16.msra.mxu0 0
    %110 = vmatprep.subr.bf16.mxu0 0
    %111 = vmatpush1.bf16.msra.mxu0 0
    %112 = vmatprep.subr.bf16.mxu0 0
    %113 = vmatpush1.bf16.msra.mxu0 0
    %114 = vmatprep.subr.bf16.mxu0 0
    %115 = vmatpush1.bf16.msra.mxu0 0
    %116 = vmatprep.subr.bf16.mxu0 0
    %117 = vmatpush1.bf16.msra.mxu0 0
    %118 = vmatprep.subr.bf16.mxu0 0
    %119 = vmatpush1.bf16.msra.mxu0 0
    %120 = vmatprep.subr.bf16.mxu0 0
    %121 = vmatpush1.bf16.msra.mxu0 0
    %122 = vmatprep.mubr.bf16.mxu0 0
    %123 = vmatmul.mubr.bf16.gmra.mrb[0].mxu0 %v88
    %v124 = vpop.f32.mrb[0].mxu0
    %v125 = vadd.f32 0.0, %v124
    %v126 = vpop.f32.mrb[0].mxu0
    %v127 = vpop.f32.mrb[0].mxu0
    %v128 = vadd.f32 0.0, %v127
    %v129 = vpop.f32.mrb[0].mxu0
    %130 = vdwg.mxu0
    %v131 = vadd.f32 %v65, %v125
    %v132 = vadd.f32 %v66, %v128
    %v133 = vmul.f32 %v131, %v131
    %v134 = vmul.f32 %v132, %v132
    %v135 = vsel %vm86, %v133, 0.0
    %136 = vadd.xlane.f32.xlu0 %v135
    %v137 = vpop.xlane.xlu0 %136
    %v138 = vsel %vm86, %v134, 0.0
    %139 = vadd.xlane.f32.xlu0 %v138
    %v140 = vpop.xlane.xlu0 %139
    %v141 = vrcp.pop 32.0
    %v142 = vmul.f32 %v137, %v141
    %v143 = vmul.f32 %v140, %v141
    %v144 = vadd.f32 %v142, 1e-06
    %v145 = vadd.f32 %v143, 1e-06
    %v146 = vrsqrt.pop %v144
    %v147 = vrsqrt.pop %v145
    %v148 = vmul.f32 %v131, %v146
    %v149 = vmul.f32 %v132, %v147
    %v150 = vld [vmem:[%s9] sm:$0x1]
    %v151 = vadd.f32 %v150, 1.0
    %v153 = vlaneseq
    %v154 = vshrl.u32 %v153, 7
    %v155 = vsub.s32 0, %v154
    %v156 = vrot.slane %v151, %v155
    %v158 = vmul.f32 %v148, %v156
    %v159 = vmul.f32 %v149, %v156
    %v160 = vpack.c.bf16 %v159, %v158
    %v161 = vld [vmem:[%s12] sm:$0xf]
    %v162 = vld [vmem:[%s12 + $0x4] sm:$0xf]
    %v163 = vld [vmem:[%s12 + $0x8] sm:$0xf]
    %v164 = vld [vmem:[%s12 + $0xc] sm:$0xf]
    %v169 = vunpack.c.l.b16 %v161
    %v170 = vunpack.c.l.b16 %v162
    %v171 = vunpack.c.l.b16 %v163
    %v172 = vunpack.c.l.b16 %v164
    %v173 = vpack.c.b16 %v170, %v169
    %v174 = vpack.c.b16 %v172, %v171
    %v178 = vsel %vm86, %v160, 0
    %180 = vmatprep.subr.bf16.mxu0 0
    %181 = vmatpush1.bf16.msra.mxu0 %v173
    %182 = vmatprep.subr.bf16.mxu0 0
    %183 = vmatpush1.bf16.msra.mxu0 %v174
    %184 = vmatprep.subr.bf16.mxu0 0
    %185 = vmatpush1.bf16.msra.mxu0 0
    %186 = vmatprep.subr.bf16.mxu0 0
    %187 = vmatpush1.bf16.msra.mxu0 0
    %188 = vmatprep.subr.bf16.mxu0 0
    %189 = vmatpush1.bf16.msra.mxu0 0
    %190 = vmatprep.subr.bf16.mxu0 0
    %191 = vmatpush1.bf16.msra.mxu0 0
    %192 = vmatprep.subr.bf16.mxu0 0
    %193 = vmatpush1.bf16.msra.mxu0 0
    %194 = vmatprep.subr.bf16.mxu0 0
    %195 = vmatpush1.bf16.msra.mxu0 0
    %196 = vmatprep.subr.bf16.mxu0 0
    %197 = vmatpush1.bf16.msra.mxu0 0
    %198 = vmatprep.subr.bf16.mxu0 0
    %199 = vmatpush1.bf16.msra.mxu0 0
    %200 = vmatprep.subr.bf16.mxu0 0
    %201 = vmatpush1.bf16.msra.mxu0 0
    %202 = vmatprep.subr.bf16.mxu0 0
    %203 = vmatpush1.bf16.msra.mxu0 0
    %204 = vmatprep.subr.bf16.mxu0 0
    %205 = vmatpush1.bf16.msra.mxu0 0
    %206 = vmatprep.subr.bf16.mxu0 0
    %207 = vmatpush1.bf16.msra.mxu0 0
    %208 = vmatprep.subr.bf16.mxu0 0
    %209 = vmatpush1.bf16.msra.mxu0 0
    %210 = vmatprep.subr.bf16.mxu0 0
    %211 = vmatpush1.bf16.msra.mxu0 0
    %212 = vmatprep.mubr.bf16.mxu0 0
    %213 = vmatmul.mubr.bf16.gmra.mrb[0].mxu0 %v178
    %v214 = vpop.f32.mrb[0].mxu0
    %v215 = vadd.f32 0.0, %v214
    %v216 = vpop.f32.mrb[0].mxu0
    %v217 = vpop.f32.mrb[0].mxu0
    %v218 = vadd.f32 0.0, %v217
    %v219 = vpop.f32.mrb[0].mxu0
    %220 = vdwg.mxu0
    %v221 = vmul.f32 %v215, 0.5
    %v222 = vmul.f32 %v218, 0.5
    %v223 = vmul.f32 %v215, 0.044715
    %v224 = vmul.f32 %v218, 0.044715
    %v225 = vmul.f32 %v223, %v215
    %v226 = vmul.f32 %v224, %v218
    %v227 = vmul.f32 %v225, %v215
    %v228 = vmul.f32 %v226, %v218
    %v229 = vadd.f32 %v215, %v227
    %v230 = vadd.f32 %v218, %v228
    %v231 = vmul.f32 %v229, 0.7978846
    %v232 = vmul.f32 %v230, 0.7978846
    %v233 = vtanh.pop %v231
    %v234 = vtanh.pop %v232
    %v235 = vadd.f32 %v233, 1.0
    %v236 = vadd.f32 %v234, 1.0
    %v237 = vmul.f32 %v221, %v235
    %v238 = vmul.f32 %v222, %v236
    %241 = vrot.lane.b32.xlu0 %v215, 64
    %v242 = vpop.permute.xlu0 %241
    %243 = vrot.lane.b32.xlu0 %v218, 64
    %v244 = vpop.permute.xlu0 %243
    %v247 = vmul.f32 %v237, %v242
    %v248 = vmul.f32 %v238, %v244
    %v249 = vpack.c.bf16 %v248, %v247
    %v250 = vld [vmem:[%s15] sm:$0xf]
    %v251 = vld [vmem:[%s15 + $0x4] sm:$0xf]
    %v252 = vld [vmem:[%s15 + $0x8] sm:$0xf]
    %v253 = vld [vmem:[%s15 + $0xc] sm:$0xf]
    %v254 = vld [vmem:[%s15 + $0x10] sm:$0xf]
    %v255 = vld [vmem:[%s15 + $0x14] sm:$0xf]
    %v256 = vld [vmem:[%s15 + $0x18] sm:$0xf]
    %v257 = vld [vmem:[%s15 + $0x1c] sm:$0xf]
    %v266 = vunpack.c.l.b16 %v250
    %v267 = vunpack.c.l.b16 %v251
    %v268 = vunpack.c.l.b16 %v252
    %v269 = vunpack.c.l.b16 %v253
    %v270 = vunpack.c.l.b16 %v254
    %v271 = vunpack.c.l.b16 %v255
    %v272 = vunpack.c.l.b16 %v256
    %v273 = vunpack.c.l.b16 %v257
    %v274 = vpack.c.b16 %v267, %v266
    %v275 = vpack.c.b16 %v269, %v268
    %v276 = vpack.c.b16 %v271, %v270
    %v277 = vpack.c.b16 %v273, %v272
    %vm282 = vcmask 523264
    %v284 = vsel %vm282, %v249, 0
    %286 = vmatprep.subr.bf16.mxu0 0
    %287 = vmatpush1.bf16.msra.mxu0 %v274
    %288 = vmatprep.subr.bf16.mxu0 0
    %289 = vmatpush1.bf16.msra.mxu0 %v275
    %290 = vmatprep.subr.bf16.mxu0 0
    %291 = vmatpush1.bf16.msra.mxu0 %v276
    %292 = vmatprep.subr.bf16.mxu0 0
    %293 = vmatpush1.bf16.msra.mxu0 %v277
    %294 = vmatprep.subr.bf16.mxu0 0
    %295 = vmatpush1.bf16.msra.mxu0 0
    %296 = vmatprep.subr.bf16.mxu0 0
    %297 = vmatpush1.bf16.msra.mxu0 0
    %298 = vmatprep.subr.bf16.mxu0 0
    %299 = vmatpush1.bf16.msra.mxu0 0
    %300 = vmatprep.subr.bf16.mxu0 0
    %301 = vmatpush1.bf16.msra.mxu0 0
    %302 = vmatprep.subr.bf16.mxu0 0
    %303 = vmatpush1.bf16.msra.mxu0 0
    %304 = vmatprep.subr.bf16.mxu0 0
    %305 = vmatpush1.bf16.msra.mxu0 0
    %306 = vmatprep.subr.bf16.mxu0 0
    %307 = vmatpush1.bf16.msra.mxu0 0
    %308 = vmatprep.subr.bf16.mxu0 0
    %309 = vmatpush1.bf16.msra.mxu0 0
    %310 = vmatprep.subr.bf16.mxu0 0
    %311 = vmatpush1.bf16.msra.mxu0 0
    %312 = vmatprep.subr.bf16.mxu0 0
    %313 = vmatpush1.bf16.msra.mxu0 0
    %314 = vmatprep.subr.bf16.mxu0 0
    %315 = vmatpush1.bf16.msra.mxu0 0
    %316 = vmatprep.subr.bf16.mxu0 0
    %317 = vmatpush1.bf16.msra.mxu0 0
    %318 = vmatprep.mubr.bf16.mxu0 0
    %319 = vmatmul.mubr.bf16.gmra.mrb[0].mxu0 %v284
    %v320 = vpop.f32.mrb[0].mxu0
    %v321 = vadd.f32 0.0, %v320
    %v322 = vpop.f32.mrb[0].mxu0
    %v323 = vpop.f32.mrb[0].mxu0
    %v324 = vadd.f32 0.0, %v323
    %v325 = vpop.f32.mrb[0].mxu0
    %326 = vdwg.mxu0
    %v327 = vadd.f32 %v131, %v321
    %v328 = vadd.f32 %v132, %v324
    %329 = vst.msk [vmem:[#allocation2] sm:$0xff] %vm86, %v327
    %330 = vst.msk [vmem:[#allocation2 + $0x8] sm:$0xff] %vm86, %v328
    %v331 = vld [vmem:[%s4] sm:$0xff]
    %v332 = vld [vmem:[%s1] sm:$0xff]
    %v333 = vpack.c.bf16 %v332, %v332
    %v334 = vld [vmem:[%s7] sm:$0xf]
    %v335 = vld [vmem:[%s7 + $0x4] sm:$0xf]
    %v336 = vld [vmem:[%s7 + $0x8] sm:$0xf]
    %v337 = vld [vmem:[%s7 + $0xc] sm:$0xf]
    %v342 = vunpack.c.l.b16 %v334
    %v343 = vunpack.c.l.b16 %v335
    %v344 = vunpack.c.l.b16 %v336
    %v345 = vunpack.c.l.b16 %v337
    %v346 = vpack.c.b16 %v343, %v342
    %v347 = vpack.c.b16 %v345, %v344
    %v351 = vsel %vm86, %v333, 0
    %353 = vmatprep.subr.bf16.mxu0 0
    %354 = vmatpush1.bf16.msra.mxu0 %v346
    %355 = vmatprep.subr.bf16.mxu0 0
    %356 = vmatpush1.bf16.msra.mxu0 %v347
    %357 = vmatprep.subr.bf16.mxu0 0
    %358 = vmatpush1.bf16.msra.mxu0 0
    %359 = vmatprep.subr.bf16.mxu0 0
    %360 = vmatpush1.bf16.msra.mxu0 0
    %361 = vmatprep.subr.bf16.mxu0 0
    %362 = vmatpush1.bf16.msra.mxu0 0
    %363 = vmatprep.subr.bf16.mxu0 0
    %364 = vmatpush1.bf16.msra.mxu0 0
    %365 = vmatprep.subr.bf16.mxu0 0
    %366 = vmatpush1.bf16.msra.mxu0 0
    %367 = vmatprep.subr.bf16.mxu0 0
    %368 = vmatpush1.bf16.msra.mxu0 0
    %369 = vmatprep.subr.bf16.mxu0 0
    %370 = vmatpush1.bf16.msra.mxu0 0
    %371 = vmatprep.subr.bf16.mxu0 0
    %372 = vmatpush1.bf16.msra.mxu0 0
    %373 = vmatprep.subr.bf16.mxu0 0
    %374 = vmatpush1.bf16.msra.mxu0 0
    %375 = vmatprep.subr.bf16.mxu0 0
    %376 = vmatpush1.bf16.msra.mxu0 0
    %377 = vmatprep.subr.bf16.mxu0 0
    %378 = vmatpush1.bf16.msra.mxu0 0
    %379 = vmatprep.subr.bf16.mxu0 0
    %380 = vmatpush1.bf16.msra.mxu0 0
    %381 = vmatprep.subr.bf16.mxu0 0
    %382 = vmatpush1.bf16.msra.mxu0 0
    %383 = vmatprep.subr.bf16.mxu0 0
    %384 = vmatpush1.bf16.msra.mxu0 0
    %385 = vmatprep.mubr.bf16.mxu0 0
    %386 = vmatmul.mubr.bf16.gmra.mrb[0].mxu0 %v351
    %v387 = vpop.f32.mrb[0].mxu0
    %v388 = vadd.f32 0.0, %v387
    %v389 = vpop.f32.mrb[0].mxu0
    %v390 = vpop.f32.mrb[0].mxu0
    %v391 = vpop.f32.mrb[0].mxu0
    %392 = vdwg.mxu0
    %v393 = vadd.f32 %v331, %v388
    %v394 = vmul.f32 %v393, %v393
    %vm395 = vcmask 130048
    %v396 = vsel %vm395, %v394, 0.0
    %397 = vadd.xlane.f32.xlu0 %v396
    %v398 = vpop.xlane.xlu0 %397
    %v399 = vrcp.pop 16.0
    %v400 = vmul.f32 %v398, %v399
    %v401 = vadd.f32 %v400, 1e-06
    %v402 = vrsqrt.pop %v401
    %v403 = vmul.f32 %v393, %v402
    %v404 = vld [vmem:[%s10] sm:$0x1]
    %v405 = vadd.f32 %v404, 1.0
    %v407 = vlaneseq
    %v408 = vshrl.u32 %v407, 7
    %v409 = vsub.s32 0, %v408
    %v410 = vrot.slane %v405, %v409
    %v412 = vmul.f32 %v403, %v410
    %v413 = vpack.c.bf16 %v412, %v412
    %v414 = vld [vmem:[%s13] sm:$0xf]
    %v415 = vld [vmem:[%s13 + $0x4] sm:$0xf]
    %v418 = vunpack.c.l.b16 %v414
    %v419 = vunpack.c.l.b16 %v415
    %v420 = vpack.c.b16 %v419, %v418
    %v423 = vsel %vm395, %v413, 0
    %425 = vmatprep.subr.bf16.mxu0 0
    %426 = vmatpush1.bf16.msra.mxu0 %v420
    %427 = vmatprep.subr.bf16.mxu0 0
    %428 = vmatpush1.bf16.msra.mxu0 0
    %429 = vmatprep.subr.bf16.mxu0 0
    %430 = vmatpush1.bf16.msra.mxu0 0
    %431 = vmatprep.subr.bf16.mxu0 0
    %432 = vmatpush1.bf16.msra.mxu0 0
    %433 = vmatprep.subr.bf16.mxu0 0
    %434 = vmatpush1.bf16.msra.mxu0 0
    %435 = vmatprep.subr.bf16.mxu0 0
    %436 = vmatpush1.bf16.msra.mxu0 0
    %437 = vmatprep.subr.bf16.mxu0 0
    %438 = vmatpush1.bf16.msra.mxu0 0
    %439 = vmatprep.subr.bf16.mxu0 0
    %440 = vmatpush1.bf16.msra.mxu0 0
    %441 = vmatprep.subr.bf16.mxu0 0
    %442 = vmatpush1.bf16.msra.mxu0 0
    %443 = vmatprep.subr.bf16.mxu0 0
    %444 = vmatpush1.bf16.msra.mxu0 0
    %445 = vmatprep.subr.bf16.mxu0 0
    %446 = vmatpush1.bf16.msra.mxu0 0
    %447 = vmatprep.subr.bf16.mxu0 0
    %448 = vmatpush1.bf16.msra.mxu0 0
    %449 = vmatprep.subr.bf16.mxu0 0
    %450 = vmatpush1.bf16.msra.mxu0 0
    %451 = vmatprep.subr.bf16.mxu0 0
    %452 = vmatpush1.bf16.msra.mxu0 0
    %453 = vmatprep.subr.bf16.mxu0 0
    %454 = vmatpush1.bf16.msra.mxu0 0
    %455 = vmatprep.subr.bf16.mxu0 0
    %456 = vmatpush1.bf16.msra.mxu0 0
    %457 = vmatprep.mubr.bf16.mxu0 0
    %458 = vmatmul.mubr.bf16.gmra.mrb[0].mxu0 %v423
    %v459 = vpop.f32.mrb[0].mxu0
    %v460 = vadd.f32 0.0, %v459
    %v461 = vpop.f32.mrb[0].mxu0
    %v462 = vpop.f32.mrb[0].mxu0
    %v463 = vpop.f32.mrb[0].mxu0
    %464 = vdwg.mxu0
    %v465 = vmul.f32 %v460, 0.5
    %v466 = vmul.f32 %v460, 0.044715
    %v467 = vmul.f32 %v466, %v460
    %v468 = vmul.f32 %v467, %v460
    %v469 = vadd.f32 %v460, %v468
    %v470 = vmul.f32 %v469, 0.7978846
    %v471 = vtanh.pop %v470
    %v472 = vadd.f32 %v471, 1.0
    %v473 = vmul.f32 %v465, %v472
    %475 = vrot.lane.b32.xlu0 %v460, 96
    %v476 = vpop.permute.xlu0 %475
    %v478 = vmul.f32 %v473, %v476
    %v479 = vpack.c.bf16 %v478, %v478
    %v480 = vld [vmem:[%s16] sm:$0xf]
    %v481 = vld [vmem:[%s16 + $0x4] sm:$0xf]
    %v482 = vld [vmem:[%s16 + $0x8] sm:$0xf]
    %v483 = vld [vmem:[%s16 + $0xc] sm:$0xf]
    %v488 = vunpack.c.l.b16 %v480
    %v489 = vunpack.c.l.b16 %v481
    %v490 = vunpack.c.l.b16 %v482
    %v491 = vunpack.c.l.b16 %v483
    %v492 = vpack.c.b16 %v489, %v488
    %v493 = vpack.c.b16 %v491, %v490
    %v497 = vsel %vm86, %v479, 0
    %499 = vmatprep.subr.bf16.mxu0 0
    %500 = vmatpush1.bf16.msra.mxu0 %v492
    %501 = vmatprep.subr.bf16.mxu0 0
    %502 = vmatpush1.bf16.msra.mxu0 %v493
    %503 = vmatprep.subr.bf16.mxu0 0
    %504 = vmatpush1.bf16.msra.mxu0 0
    %505 = vmatprep.subr.bf16.mxu0 0
    %506 = vmatpush1.bf16.msra.mxu0 0
    %507 = vmatprep.subr.bf16.mxu0 0
    %508 = vmatpush1.bf16.msra.mxu0 0
    %509 = vmatprep.subr.bf16.mxu0 0
    %510 = vmatpush1.bf16.msra.mxu0 0
    %511 = vmatprep.subr.bf16.mxu0 0
    %512 = vmatpush1.bf16.msra.mxu0 0
    %513 = vmatprep.subr.bf16.mxu0 0
    %514 = vmatpush1.bf16.msra.mxu0 0
    %515 = vmatprep.subr.bf16.mxu0 0
    %516 = vmatpush1.bf16.msra.mxu0 0
    %517 = vmatprep.subr.bf16.mxu0 0
    %518 = vmatpush1.bf16.msra.mxu0 0
    %519 = vmatprep.subr.bf16.mxu0 0
    %520 = vmatpush1.bf16.msra.mxu0 0
    %521 = vmatprep.subr.bf16.mxu0 0
    %522 = vmatpush1.bf16.msra.mxu0 0
    %523 = vmatprep.subr.bf16.mxu0 0
    %524 = vmatpush1.bf16.msra.mxu0 0
    %525 = vmatprep.subr.bf16.mxu0 0
    %526 = vmatpush1.bf16.msra.mxu0 0
    %527 = vmatprep.subr.bf16.mxu0 0
    %528 = vmatpush1.bf16.msra.mxu0 0
    %529 = vmatprep.subr.bf16.mxu0 0
    %530 = vmatpush1.bf16.msra.mxu0 0
    %531 = vmatprep.mubr.bf16.mxu0 0
    %532 = vmatmul.mubr.bf16.gmra.mrb[0].mxu0 %v497
    %v533 = vpop.f32.mrb[0].mxu0
    %v534 = vadd.f32 0.0, %v533
    %v535 = vpop.f32.mrb[0].mxu0
    %v536 = vpop.f32.mrb[0].mxu0
    %v537 = vpop.f32.mrb[0].mxu0
    %538 = vdwg.mxu0
    %v539 = vadd.f32 %v393, %v534
    %540 = vst.msk [vmem:[#allocation4] sm:$0xff] %vm395, %v539
    %v541 = vld [vmem:[%s5] sm:$0xff]
    %v542 = vld [vmem:[%s2] sm:$0xff]
    %v543 = vpack.c.bf16 %v542, %v542
    %v544 = vld [vmem:[%s8] sm:$0xf]
    %v545 = vld [vmem:[%s8 + $0x4] sm:$0xf]
    %v546 = vld [vmem:[%s8 + $0x8] sm:$0xf]
    %v547 = vld [vmem:[%s8 + $0xc] sm:$0xf]
    %v552 = vunpack.c.l.b16 %v544
    %v553 = vunpack.c.l.b16 %v545
    %v554 = vunpack.c.l.b16 %v546
    %v555 = vunpack.c.l.b16 %v547
    %v556 = vpack.c.b16 %v553, %v552
    %v557 = vpack.c.b16 %v555, %v554
    %v561 = vsel %vm86, %v543, 0
    %563 = vmatprep.subr.bf16.mxu0 0
    %564 = vmatpush1.bf16.msra.mxu0 %v556
    %565 = vmatprep.subr.bf16.mxu0 0
    %566 = vmatpush1.bf16.msra.mxu0 %v557
    %567 = vmatprep.subr.bf16.mxu0 0
    %568 = vmatpush1.bf16.msra.mxu0 0
    %569 = vmatprep.subr.bf16.mxu0 0
    %570 = vmatpush1.bf16.msra.mxu0 0
    %571 = vmatprep.subr.bf16.mxu0 0
    %572 = vmatpush1.bf16.msra.mxu0 0
    %573 = vmatprep.subr.bf16.mxu0 0
    %574 = vmatpush1.bf16.msra.mxu0 0
    %575 = vmatprep.subr.bf16.mxu0 0
    %576 = vmatpush1.bf16.msra.mxu0 0
    %577 = vmatprep.subr.bf16.mxu0 0
    %578 = vmatpush1.bf16.msra.mxu0 0
    %579 = vmatprep.subr.bf16.mxu0 0
    %580 = vmatpush1.bf16.msra.mxu0 0
    %581 = vmatprep.subr.bf16.mxu0 0
    %582 = vmatpush1.bf16.msra.mxu0 0
    %583 = vmatprep.subr.bf16.mxu0 0
    %584 = vmatpush1.bf16.msra.mxu0 0
    %585 = vmatprep.subr.bf16.mxu0 0
    %586 = vmatpush1.bf16.msra.mxu0 0
    %587 = vmatprep.subr.bf16.mxu0 0
    %588 = vmatpush1.bf16.msra.mxu0 0
    %589 = vmatprep.subr.bf16.mxu0 0
    %590 = vmatpush1.bf16.msra.mxu0 0
    %591 = vmatprep.subr.bf16.mxu0 0
    %592 = vmatpush1.bf16.msra.mxu0 0
    %593 = vmatprep.subr.bf16.mxu0 0
    %594 = vmatpush1.bf16.msra.mxu0 0
    %595 = vmatprep.mubr.bf16.mxu0 0
    %596 = vmatmul.mubr.bf16.gmra.mrb[0].mxu0 %v561
    %v597 = vpop.f32.mrb[0].mxu0
    %v598 = vadd.f32 0.0, %v597
    %v599 = vpop.f32.mrb[0].mxu0
    %v600 = vpop.f32.mrb[0].mxu0
    %v601 = vpop.f32.mrb[0].mxu0
    %602 = vdwg.mxu0
    %v603 = vadd.f32 %v541, %v598
    %v604 = vmul.f32 %v603, %v603
    %vm605 = vcmask 195584
    %v606 = vsel %vm605, %v604, 0.0
    %607 = vadd.xlane.f32.xlu0 %v606
    %v608 = vpop.xlane.xlu0 %607
    %v609 = vrcp.pop 24.0
    %v610 = vmul.f32 %v608, %v609
    %v611 = vadd.f32 %v610, 1e-06
    %v612 = vrsqrt.pop %v611
    %v613 = vmul.f32 %v603, %v612
    %v614 = vld [vmem:[%s11] sm:$0x1]
    %v615 = vadd.f32 %v614, 1.0
    %v617 = vlaneseq
    %v618 = vshrl.u32 %v617, 7
    %v619 = vsub.s32 0, %v618
    %v620 = vrot.slane %v615, %v619
    %v622 = vmul.f32 %v613, %v620
    %v623 = vpack.c.bf16 %v622, %v622
    %v624 = vld [vmem:[%s14] sm:$0xf]
    %v625 = vld [vmem:[%s14 + $0x4] sm:$0xf]
    %v626 = vld [vmem:[%s14 + $0x8] sm:$0xf]
    %v630 = vunpack.c.l.b16 %v624
    %v631 = vunpack.c.l.b16 %v625
    %v632 = vunpack.c.l.b16 %v626
    %v633 = vpack.c.b16 %v631, %v630
    %v634 = vpack.c.b16 %v632, %v632
    %v637 = vsel %vm605, %v623, 0
    %vm639 = vcmask 1043456
    %v641 = vsel %vm639, %v634, 0
    %643 = vmatprep.subr.bf16.mxu0 0
    %644 = vmatpush1.bf16.msra.mxu0 %v633
    %645 = vmatprep.subr.bf16.mxu0 0
    %646 = vmatpush1.bf16.msra.mxu0 %v641
    %647 = vmatprep.subr.bf16.mxu0 0
    %648 = vmatpush1.bf16.msra.mxu0 0
    %649 = vmatprep.subr.bf16.mxu0 0
    %650 = vmatpush1.bf16.msra.mxu0 0
    %651 = vmatprep.subr.bf16.mxu0 0
    %652 = vmatpush1.bf16.msra.mxu0 0
    %653 = vmatprep.subr.bf16.mxu0 0
    %654 = vmatpush1.bf16.msra.mxu0 0
    %655 = vmatprep.subr.bf16.mxu0 0
    %656 = vmatpush1.bf16.msra.mxu0 0
    %657 = vmatprep.subr.bf16.mxu0 0
    %658 = vmatpush1.bf16.msra.mxu0 0
    %659 = vmatprep.subr.bf16.mxu0 0
    %660 = vmatpush1.bf16.msra.mxu0 0
    %661 = vmatprep.subr.bf16.mxu0 0
    %662 = vmatpush1.bf16.msra.mxu0 0
    %663 = vmatprep.subr.bf16.mxu0 0
    %664 = vmatpush1.bf16.msra.mxu0 0
    %665 = vmatprep.subr.bf16.mxu0 0
    %666 = vmatpush1.bf16.msra.mxu0 0
    %667 = vmatprep.subr.bf16.mxu0 0
    %668 = vmatpush1.bf16.msra.mxu0 0
    %669 = vmatprep.subr.bf16.mxu0 0
    %670 = vmatpush1.bf16.msra.mxu0 0
    %671 = vmatprep.subr.bf16.mxu0 0
    %672 = vmatpush1.bf16.msra.mxu0 0
    %673 = vmatprep.subr.bf16.mxu0 0
    %674 = vmatpush1.bf16.msra.mxu0 0
    %675 = vmatprep.mubr.bf16.mxu0 0
    %676 = vmatmul.mubr.bf16.gmra.mrb[0].mxu0 %v637
    %v677 = vpop.f32.mrb[0].mxu0
    %v678 = vadd.f32 0.0, %v677
    %v679 = vpop.f32.mrb[0].mxu0
    %v680 = vpop.f32.mrb[0].mxu0
    %v681 = vpop.f32.mrb[0].mxu0
    %682 = vdwg.mxu0
    %v683 = vmul.f32 %v678, 0.5
    %v684 = vmul.f32 %v678, 0.044715
    %v685 = vmul.f32 %v684, %v678
    %v686 = vmul.f32 %v685, %v678
    %v687 = vadd.f32 %v678, %v686
    %v688 = vmul.f32 %v687, 0.7978846
    %v689 = vtanh.pop %v688
    %v690 = vadd.f32 %v689, 1.0
    %v691 = vmul.f32 %v683, %v690
    %693 = vrot.lane.b32.xlu0 %v678, 80
    %v694 = vpop.permute.xlu0 %693
    %v696 = vmul.f32 %v691, %v694
    %v697 = vpack.c.bf16 %v696, %v696
    %v698 = vld [vmem:[%s17] sm:$0xf]
    %v699 = vld [vmem:[%s17 + $0x4] sm:$0xf]
    %v700 = vld [vmem:[%s17 + $0x8] sm:$0xf]
    %v701 = vld [vmem:[%s17 + $0xc] sm:$0xf]
    %v702 = vld [vmem:[%s17 + $0x10] sm:$0xf]
    %v703 = vld [vmem:[%s17 + $0x14] sm:$0xf]
    %v710 = vunpack.c.l.b16 %v698
    %v711 = vunpack.c.l.b16 %v699
    %v712 = vunpack.c.l.b16 %v700
    %v713 = vunpack.c.l.b16 %v701
    %v714 = vunpack.c.l.b16 %v702
    %v715 = vunpack.c.l.b16 %v703
    %v716 = vpack.c.b16 %v711, %v710
    %v717 = vpack.c.b16 %v713, %v712
    %v718 = vpack.c.b16 %v715, %v714
    %vm722 = vcmask 392192
    %v724 = vsel %vm722, %v697, 0
    %726 = vmatprep.subr.bf16.mxu0 0
    %727 = vmatpush1.bf16.msra.mxu0 %v716
    %728 = vmatprep.subr.bf16.mxu0 0
    %729 = vmatpush1.bf16.msra.mxu0 %v717
    %730 = vmatprep.subr.bf16.mxu0 0
    %731 = vmatpush1.bf16.msra.mxu0 %v718
    %732 = vmatprep.subr.bf16.mxu0 0
    %733 = vmatpush1.bf16.msra.mxu0 0
    %734 = vmatprep.subr.bf16.mxu0 0
    %735 = vmatpush1.bf16.msra.mxu0 0
    %736 = vmatprep.subr.bf16.mxu0 0
    %737 = vmatpush1.bf16.msra.mxu0 0
    %738 = vmatprep.subr.bf16.mxu0 0
    %739 = vmatpush1.bf16.msra.mxu0 0
    %740 = vmatprep.subr.bf16.mxu0 0
    %741 = vmatpush1.bf16.msra.mxu0 0
    %742 = vmatprep.subr.bf16.mxu0 0
    %743 = vmatpush1.bf16.msra.mxu0 0
    %744 = vmatprep.subr.bf16.mxu0 0
    %745 = vmatpush1.bf16.msra.mxu0 0
    %746 = vmatprep.subr.bf16.mxu0 0
    %747 = vmatpush1.bf16.msra.mxu0 0
    %748 = vmatprep.subr.bf16.mxu0 0
    %749 = vmatpush1.bf16.msra.mxu0 0
    %750 = vmatprep.subr.bf16.mxu0 0
    %751 = vmatpush1.bf16.msra.mxu0 0
    %752 = vmatprep.subr.bf16.mxu0 0
    %753 = vmatpush1.bf16.msra.mxu0 0
    %754 = vmatprep.subr.bf16.mxu0 0
    %755 = vmatpush1.bf16.msra.mxu0 0
    %756 = vmatprep.subr.bf16.mxu0 0
    %757 = vmatpush1.bf16.msra.mxu0 0
    %758 = vmatprep.mubr.bf16.mxu0 0
    %759 = vmatmul.mubr.bf16.gmra.mrb[0].mxu0 %v724
    %v760 = vpop.f32.mrb[0].mxu0
    %v761 = vadd.f32 0.0, %v760
    %v762 = vpop.f32.mrb[0].mxu0
    %v763 = vpop.f32.mrb[0].mxu0
    %v764 = vpop.f32.mrb[0].mxu0
    %765 = vdwg.mxu0
    %v766 = vadd.f32 %v603, %v761
    %767 = vst.msk [vmem:[#allocation6] sm:$0xff] %vm605, %v766
    // Predicated region
    $region74: #{joint_decoder_layer_pallas.5} parent=1 // pred_check
      _
    $region75: #{joint_decoder_layer_pallas.5} parent=1 // pred_check_branch
      %769 = sbr.rel (0) target = $region77
    $region76: #{joint_decoder_layer_pallas.5} parent=1 // pred_region
      %s771 = ssub.s32 256, 256
      %772 = vsyncadd [#allocation3], %s771
      %s773 = sshll.u32 [#allocation2], 4
      %s774 = int_to_ptr.vmem [resolvable:$true] %s773
      %779 = dma.vmem_to_hbm [thread:$0]  %s774, 256, %s18, [#allocation3], 128, 128, 8
    $region77: #{joint_decoder_layer_pallas.5} parent=1 // pred_fallthru
      _
    // Predicated region
    $region78: #{joint_decoder_layer_pallas.5} parent=1 // pred_check
      _
    $region79: #{joint_decoder_layer_pallas.5} parent=1 // pred_check_branch
      %781 = sbr.rel (0) target = $region81
    $region80: #{joint_decoder_layer_pallas.5} parent=1 // pred_region
      %s783 = ssub.s32 128, 128
      %784 = vsyncadd [#allocation5], %s783
      %s786 = sshll.u32 [#allocation4], 4
      %s787 = int_to_ptr.vmem [resolvable:$true] %s786
      %789 = dma.vmem_to_hbm [thread:$0]  %s787, 128, %s19, [#allocation5]
    $region81: #{joint_decoder_layer_pallas.5} parent=1 // pred_fallthru
      _
    // Predicated region
    $region82: #{joint_decoder_layer_pallas.5} parent=1 // pred_check
      _
    $region83: #{joint_decoder_layer_pallas.5} parent=1 // pred_check_branch
      %791 = sbr.rel (0) target = $region85
    $region84: #{joint_decoder_layer_pallas.5} parent=1 // pred_region
      %s793 = ssub.s32 128, 128
      %794 = vsyncadd [#allocation5], %s793
      %s796 = sshll.u32 [#allocation6], 4
      %s797 = int_to_ptr.vmem [resolvable:$true] %s796
      %799 = dma.vmem_to_hbm [thread:$0]  %s797, 128, %s20, [#allocation5]
    $region85: #{joint_decoder_layer_pallas.5} parent=1 // pred_fallthru
      _
    // Predicated region
    $region86: #{joint_decoder_layer_pallas.5} parent=1 // pred_check
      _
    $region87: #{joint_decoder_layer_pallas.5} parent=1 // pred_check_branch
      %801 = sbr.rel (0) target = $region89
    $region88: #{joint_decoder_layer_pallas.5} parent=1 // pred_region
      %802 = dma.done [#allocation3], 256
    $region89: #{joint_decoder_layer_pallas.5} parent=1 // pred_fallthru
      _
    // Predicated region
    $region90: #{joint_decoder_layer_pallas.5} parent=1 // pred_check
      _
    $region91: #{joint_decoder_layer_pallas.5} parent=1 // pred_check_branch
      %804 = sbr.rel (0) target = $region93
    $region92: #{joint_decoder_layer_pallas.5} parent=1 // pred_region
      %805 = dma.done [#allocation5], 128
    $region93: #{joint_decoder_layer_pallas.5} parent=1 // pred_fallthru
      _
    // Predicated region
    $region94: #{joint_decoder_layer_pallas.5} parent=1 // pred_check
      _
    $region95: #{joint_decoder_layer_pallas.5} parent=1 // pred_check_branch
      %807 = sbr.rel (0) target = $region97
    $region96: #{joint_decoder_layer_pallas.5} parent=1 // pred_region
      %808 = dma.done [#allocation5], 128
    $region97: #{joint_decoder_layer_pallas.5} parent=1 // pred_fallthru
      _
    %809 = vsyncpa [#allocation3], 1
    %810 = vsyncpa [#allocation5], 1

</llo_original>
